<compile_context>
chip_gen: v7x
topology: tpu7x:2x2x1
jax: 0.10.0
libtpu: 0.0.40
codegen_flags: <defaults>
</compile_context>

<pallas_src>
import functools

import jax
import jax.numpy as jnp
from jax.experimental import pallas as pl
from jax.experimental.pallas import tpu as pltpu


def _round_up(x, m):
    return ((x + m - 1) // m) * m


@functools.lru_cache(maxsize=None)
def _single_buffer_supported():
    """Feature-detect BlockSpec(pipeline_mode=pl.Buffered(1)) on this install.

    Runs a tiny probe kernel that mimics the real call (PrefetchScalarGridSpec,
    2-D grid, VMEM scratch, constant-index single-buffered input).  Falls back
    to the default double-buffered pipeline if anything fails.
    """
    try:
        def _k(x_ref, w_ref, o_ref, acc_ref):
            acc_ref[...] = x_ref[...] + w_ref[...]
            o_ref[...] = acc_ref[...]

        out = pl.pallas_call(
            _k,
            out_shape=jax.ShapeDtypeStruct((8, 128), jnp.float32),
            grid_spec=pltpu.PrefetchScalarGridSpec(
                num_scalar_prefetch=0,
                grid=(1, 1),
                in_specs=[
                    pl.BlockSpec((8, 128), lambda i, k: (0, 0)),
                    pl.BlockSpec((8, 128), lambda i, k: (0, 0),
                                 pipeline_mode=pl.Buffered(1)),
                ],
                out_specs=pl.BlockSpec((8, 128), lambda i, k: (0, 0)),
                scratch_shapes=[pltpu.VMEM((8, 128), jnp.float32)],
            ),
            compiler_params=pltpu.CompilerParams(
                dimension_semantics=("parallel", "arbitrary")),
        )(jnp.zeros((8, 128), jnp.float32), jnp.ones((8, 128), jnp.float32))
        jax.block_until_ready(out)
        return bool(jnp.all(out == 1.0))
    except Exception:
        return False


@functools.lru_cache(maxsize=None)
def _vmem_budget_bytes():
    """Usable VMEM (bytes), generation-aware, with headroom for Mosaic scratch."""
    cap = None
    try:
        cap = getattr(pltpu.get_tpu_info(), "vmem_capacity_bytes", None)
    except Exception:
        cap = None
    if not cap:
        cap = 64 << 20  # conservative fallback: v7x per-TC physical VMEM
    cap = int(cap)
    return max(cap - (16 << 20), cap // 2)


def _choose_tm(M, tm_max, fixed_bytes, per_row_bytes, budget):
    """Pick the row tile: fit VMEM, then minimize per-TC work (2-TC chips),
    then total padded rows (padding waste / 1-TC chips), then prefer big tiles."""
    m8 = _round_up(M, 8)
    cands = sorted({min(c, m8) for c in (128, 256, 512) if c <= max(tm_max, 128)})
    feasible = [t for t in cands if fixed_bytes + t * per_row_bytes <= budget]
    if not feasible:
        feasible = cands[:1]
    best, best_key = None, None
    for t in feasible:
        m_pad = _round_up(M, t)
        g = m_pad // t
        key = (((g + 1) // 2) * t,  # per-TensorCore rows assuming 2 TCs (v7x)
               m_pad,               # total padded rows (HBM traffic / flops)
               -t)                  # prefer fewer, larger grid steps
        if best_key is None or key < best_key:
            best, best_key = (t, m_pad, g), key
    return best


def ffn_kernel(x_ref, w1_ref, w2_ref, gamma_ref, beta_ref, o_ref, acc_ref,
               *, d_in, eps):
    # x: (tm, d_in_pad); w1: (d_in_pad, tk); w2: (tk, d_in_pad);
    # gamma/beta: (1, d_in_pad) f32; o: (tm, d_in_pad); acc: (tm, d_in_pad) f32.
    k = pl.program_id(1)

    @pl.when(k == 0)
    def _init():
        acc_ref[...] = jnp.zeros_like(acc_ref)

    x_in = x_ref[...]                              # native dtype (residual src)

    # Linear1 -> ReLU -> Linear2 partial sum over this d_hid slice.
    # MXU operands in the weights' (possibly bf16) dtype, f32 accumulation.
    h = jnp.dot(x_in.astype(w1_ref.dtype), w1_ref[...],
                preferred_element_type=jnp.float32)
    h = jnp.maximum(h, 0.0)
    acc_ref[...] += jnp.dot(h.astype(w2_ref.dtype), w2_ref[...],
                            preferred_element_type=jnp.float32)

    @pl.when(k == pl.num_programs(1) - 1)
    def _finalize():
        # Residual add (dropout == identity) + LayerNorm, all in f32.
        y = acc_ref[...] + x_in.astype(jnp.float32)
        d_in_pad = y.shape[-1]
        inv_n = 1.0 / d_in
        mean = jnp.sum(y, axis=-1, keepdims=True) * inv_n
        diff = y - mean
        sum_sq = jnp.sum(diff * diff, axis=-1, keepdims=True)
        n_pad = d_in_pad - d_in
        if n_pad:
            # Padded lanes of y are exactly 0 (x, W2 cols, gamma, beta are
            # zero-padded), so each contributes mean^2 to sum_sq: correct with
            # a per-row scalar instead of an iota+where mask over the tile.
            sum_sq = sum_sq - n_pad * (mean * mean)
        var = sum_sq * inv_n
        y_hat = diff * jax.lax.rsqrt(var + eps)
        o_ref[...] = (y_hat * gamma_ref[...] + beta_ref[...]).astype(o_ref.dtype)


def positionwise_feed_forward(x, w1, w2, gamma, beta, *, eps=1e-5,
                              tm_max=512, tk=None, mxu_bf16=True):
    """x: (batch, seq, d_in); w1: (d_in, d_hid); w2: (d_hid, d_in);
    gamma, beta: (d_in,).  Returns (batch, seq, d_in).

    Weights are stored pre-transposed so the kernel computes x @ W, matching
    PyTorch's x @ weight.T semantics.

    mxu_bf16: feed f32 matmuls to the MXU as bf16 (f32 accumulation; residual
      and LayerNorm stay f32).  Set False for bit-accurate f32 matmuls.
    tk: optional d_hid tile (multiple of 128) forcing the K-tiled accumulator
      path; by default derived from the generation-aware VMEM budget.
    """
    batch, seq, d_in = x.shape
    d_hid = w1.shape[1]
    assert w1.shape == (d_in, d_hid)
    assert w2.shape == (d_hid, d_in)
    assert gamma.shape == (d_in,) and beta.shape == (d_in,)

    M = batch * seq
    d_in_pad = _round_up(d_in, 128)

    # MXU operand dtype: bf16 for f32 weights when allowed, else native.
    w_dtype = jnp.bfloat16 if (mxu_bf16 and w1.dtype == jnp.float32) else w1.dtype
    w_isz = jnp.dtype(w_dtype).itemsize
    x_isz = jnp.dtype(x.dtype).itemsize

    budget = _vmem_budget_bytes()
    single_buf = _single_buffer_supported()

    # ---- d_hid (K) tiling ---------------------------------------------------
    d_hid_pad0 = _round_up(d_hid, 128)
    if tk is None:
        res_buf = 1 if single_buf else 2
        full_weight_bytes = res_buf * 2 * d_in_pad * d_hid_pad0 * w_isz
        if full_weight_bytes <= budget // 2:
            tk_eff = d_hid_pad0                       # weights fully resident
        else:
            # Double-buffered K-slices of W1/W2 within half the VMEM budget.
            per_lane = 2 * 2 * d_in_pad * w_isz
            tk_eff = max(128, ((budget // 2) // per_lane) // 128 * 128)
            tk_eff = min(tk_eff, d_hid_pad0)
            # Snap down to a multiple of 128 that divides d_hid_pad0 exactly.
            for cand in range(tk_eff, 127, -128):
                if d_hid_pad0 % cand == 0:
                    tk_eff = cand
                    break
    else:
        tk_eff = min(_round_up(tk, 128), d_hid_pad0)
    d_hid_pad = _round_up(d_hid_pad0, tk_eff)
    grid_k = d_hid_pad // tk_eff
    resident = grid_k == 1

    # ---- VMEM accounting & row tile ----------------------------------------
    n_wbuf = 1 if (resident and single_buf) else 2
    fixed_bytes = (n_wbuf * 2 * d_in_pad * tk_eff * w_isz      # W1 + W2 slices
                   + 2 * 2 * d_in_pad * 4)                     # gamma, beta (f32)
    # Per row of tm: x/out tiles (double-buffered), f32 accumulator, f32 hidden
    # tile, and epilogue temporaries.
    per_row_bytes = d_in_pad * (2 * x_isz + 2 * x_isz + 4 + 8) + 4 * tk_eff
    tm_eff, M_pad, grid_m = _choose_tm(M, tm_max, fixed_bytes, per_row_bytes,
                                       budget)

    # ---- Pad / cast operands (all padding is zero-fill; LayerNorm relies on it)
    x2d = x.reshape(M, d_in)
    if M_pad != M or d_in_pad != d_in:
        x2d = jnp.pad(x2d, ((0, M_pad - M), (0, d_in_pad - d_in)))
    w1p = jnp.pad(w1.astype(w_dtype),
                  ((0, d_in_pad - d_in), (0, d_hid_pad - d_hid)))
    w2p = jnp.pad(w2.astype(w_dtype),
                  ((0, d_hid_pad - d_hid), (0, d_in_pad - d_in)))
    gp = jnp.pad(gamma.astype(jnp.float32), (0, d_in_pad - d_in)).reshape(1, d_in_pad)
    bp = jnp.pad(beta.astype(jnp.float32), (0, d_in_pad - d_in)).reshape(1, d_in_pad)

    # ---- BlockSpecs ---------------------------------------------------------
    def _resident_spec(shape, index_map):
        if single_buf:
            return pl.BlockSpec(shape, index_map, pipeline_mode=pl.Buffered(1))
        return pl.BlockSpec(shape, index_map)

    if resident:
        w1_spec = _resident_spec((d_in_pad, tk_eff), lambda i, k: (0, 0))
        w2_spec = _resident_spec((tk_eff, d_in_pad), lambda i, k: (0, 0))
    else:
        w1_spec = pl.BlockSpec((d_in_pad, tk_eff), lambda i, k: (0, k))
        w2_spec = pl.BlockSpec((tk_eff, d_in_pad), lambda i, k: (k, 0))
    g_spec = _resident_spec((1, d_in_pad), lambda i, k: (0, 0))
    b_spec = _resident_spec((1, d_in_pad), lambda i, k: (0, 0))

    kernel = functools.partial(ffn_kernel, d_in=d_in, eps=eps)

    out2d = pl.pallas_call(
        kernel,
        out_shape=jax.ShapeDtypeStruct((M_pad, d_in_pad), x.dtype),
        grid_spec=pltpu.PrefetchScalarGridSpec(
            num_scalar_prefetch=0,
            grid=(grid_m, grid_k),                   # reduction axis last
            in_specs=[
                pl.BlockSpec((tm_eff, d_in_pad), lambda i, k: (i, 0)),   # x rows
                w1_spec, w2_spec, g_spec, b_spec,
            ],
            out_specs=pl.BlockSpec((tm_eff, d_in_pad), lambda i, k: (i, 0)),
            scratch_shapes=[pltpu.VMEM((tm_eff, d_in_pad), jnp.float32)],
        ),
        compiler_params=pltpu.CompilerParams(
            dimension_semantics=("parallel", "arbitrary"),
            vmem_limit_bytes=int(budget),
        ),
    )(x2d, w1p, w2p, gp, bp)

    return out2d[:M, :d_in].reshape(batch, seq, d_in)


def reference(x, w1, w2, gamma, beta, eps=1e-5):
    h = jnp.maximum(jnp.einsum("bsd,dh->bsh", x, w1), 0.0)
    y = jnp.einsum("bsh,hd->bsd", h, w2) + x
    mean = jnp.mean(y, axis=-1, keepdims=True)
    var = jnp.mean(jnp.square(y - mean), axis=-1, keepdims=True)
    return (y - mean) * jax.lax.rsqrt(var + eps) * gamma + beta


if __name__ == "__main__":
    key = jax.random.PRNGKey(0)
    kx, k1, k2 = jax.random.split(key, 3)

    # --- Test 1: lane-aligned shapes, f32 -----------------------------------
    batch, seq, d_in, d_hid = 2, 128, 128, 256
    x = jax.random.normal(kx, (batch, seq, d_in), dtype=jnp.float32)
    w1 = jax.random.uniform(k1, (d_in, d_hid), jnp.float32,
                            minval=-1.0 / (d_in ** 0.5), maxval=1.0 / (d_in ** 0.5))
    w2 = jax.random.uniform(k2, (d_hid, d_in), jnp.float32,
                            minval=-1.0 / (d_hid ** 0.5), maxval=1.0 / (d_hid ** 0.5))
    gamma = jnp.ones((d_in,), jnp.float32)
    beta = jnp.zeros((d_in,), jnp.float32)
    ref = reference(x, w1, w2, gamma, beta)

    # 1a: default fast path (bf16 MXU feeds, f32 accumulation + epilogue).
    out = jax.block_until_ready(positionwise_feed_forward(x, w1, w2, gamma, beta))
    assert out.shape == (batch, seq, d_in)
    assert jnp.allclose(out, ref, atol=5e-2, rtol=5e-2), "f32 fast-path mismatch"

    # 1b: exact f32 MXU path.
    out_hi = jax.block_until_ready(
        positionwise_feed_forward(x, w1, w2, gamma, beta, mxu_bf16=False))
    assert jnp.allclose(out_hi, ref, atol=1e-4, rtol=1e-4), "f32 exact-path mismatch"

    # --- Test 2: bf16 inputs -> bf16 MXU feeds, f32 accumulation ------------
    xb = x.astype(jnp.bfloat16)
    w1b = w1.astype(jnp.bfloat16)
    w2b = w2.astype(jnp.bfloat16)
    out_bf16 = jax.block_until_ready(positionwise_feed_forward(
        xb, w1b, w2b, gamma.astype(jnp.bfloat16), beta.astype(jnp.bfloat16)))
    ref_bf16 = reference(xb.astype(jnp.float32), w1b.astype(jnp.float32),
                         w2b.astype(jnp.float32), gamma, beta)
    assert out_bf16.dtype == jnp.bfloat16
    assert jnp.allclose(out_bf16.astype(jnp.float32), ref_bf16,
                        atol=5e-2, rtol=5e-2), "bf16 mismatch vs reference"

    # --- Test 3: unaligned dims -> lane-dense padding + scalar var correction
    b3, s3, di3, dh3 = 2, 8, 64, 96
    k3, k4, k5 = jax.random.split(jax.random.PRNGKey(1), 3)
    x3 = jax.random.normal(k3, (b3, s3, di3), dtype=jnp.float32)
    w13 = jax.random.uniform(k4, (di3, dh3), jnp.float32,
                             minval=-1.0 / (di3 ** 0.5), maxval=1.0 / (di3 ** 0.5))
    w23 = jax.random.uniform(k5, (dh3, di3), jnp.float32,
                             minval=-1.0 / (dh3 ** 0.5), maxval=1.0 / (dh3 ** 0.5))
    g3 = jnp.ones((di3,), jnp.float32)
    be3 = jnp.zeros((di3,), jnp.float32)
    out3 = jax.block_until_ready(
        positionwise_feed_forward(x3, w13, w23, g3, be3, mxu_bf16=False))
    ref3 = reference(x3, w13, w23, g3, be3)
    assert out3.shape == (b3, s3, di3)
    assert jnp.allclose(out3, ref3, atol=1e-4, rtol=1e-4), "padded-path mismatch"

    # --- Test 4: forced d_hid K-tiling (accumulator path, grid_k=3) ---------
    b4, s4, di4, dh4 = 2, 16, 64, 384
    k6, k7, k8 = jax.random.split(jax.random.PRNGKey(2), 3)
    x4 = jax.random.normal(k6, (b4, s4, di4), dtype=jnp.float32)
    w14 = jax.random.uniform(k7, (di4, dh4), jnp.float32,
                             minval=-1.0 / (di4 ** 0.5), maxval=1.0 / (di4 ** 0.5))
    w24 = jax.random.uniform(k8, (dh4, di4), jnp.float32,
                             minval=-1.0 / (dh4 ** 0.5), maxval=1.0 / (dh4 ** 0.5))
    g4 = jnp.ones((di4,), jnp.float32)
    be4 = jnp.zeros((di4,), jnp.float32)
    out4 = jax.block_until_ready(
        positionwise_feed_forward(x4, w14, w24, g4, be4, tk=128, mxu_bf16=False))
    ref4 = reference(x4, w14, w24, g4, be4)
    assert out4.shape == (b4, s4, di4)
    assert jnp.allclose(out4, ref4, atol=1e-4, rtol=1e-4), "k-tiled-path mismatch"

    print("KERNEL_OK")
</pallas_src>

<mosaic_0001>
module attributes {stable_mosaic.version = 11 : i64} {
  func.func @_k(%arg0: i32, %arg1: i32, %arg2: memref<8x128xf32, #tpu.memory_space<vmem>>, %arg3: memref<8x128xf32, #tpu.memory_space<vmem>>, %arg4: memref<8x128xf32, #tpu.memory_space<vmem>>, %arg5: memref<8x128xf32, #tpu.memory_space<vmem>>) attributes {dimension_semantics = [#tpu.dimension_semantics<parallel>, #tpu.dimension_semantics<arbitrary>], iteration_bounds = array<i64: 1, 1>, scalar_prefetch = 0 : i64, scratch_operands = 1 : i64, tpu.core_type = #tpu.core_type<tc>, window_params = [{pipeline_mode = #tpu.pipeline_mode<synchronous>, transform_indices = @transform_0, window_bounds = array<i64: 8, 128>}, {pipeline_mode = #tpu.pipeline_mode<synchronous>, transform_indices = @transform_1, window_bounds = array<i64: 8, 128>}, {pipeline_mode = #tpu.pipeline_mode<synchronous>, transform_indices = @transform_2, window_bounds = array<i64: 8, 128>}]} {
    %c0 = arith.constant 0 : index
    %c0_0 = arith.constant 0 : index
    %0 = vector.load %arg2[%c0, %c0_0] : memref<8x128xf32, #tpu.memory_space<vmem>>, vector<8x128xf32>
    %c0_1 = arith.constant 0 : index
    %c0_2 = arith.constant 0 : index
    %1 = vector.load %arg3[%c0_1, %c0_2] : memref<8x128xf32, #tpu.memory_space<vmem>>, vector<8x128xf32>
    %2 = arith.addf %0, %1 : vector<8x128xf32>
    %c0_3 = arith.constant 0 : index
    %c0_4 = arith.constant 0 : index
    %3 = vector.load %arg5[%c0_3, %c0_4] : memref<8x128xf32, #tpu.memory_space<vmem>>, vector<8x128xf32>
    tpu.vector_store %arg5[%c0_3, %c0_4], %2 {strides = array<i32>} : memref<8x128xf32, #tpu.memory_space<vmem>>, vector<8x128xf32>,
    %c0_5 = arith.constant 0 : index
    %c0_6 = arith.constant 0 : index
    %4 = vector.load %arg5[%c0_5, %c0_6] : memref<8x128xf32, #tpu.memory_space<vmem>>, vector<8x128xf32>
    %c0_7 = arith.constant 0 : index
    %c0_8 = arith.constant 0 : index
    %5 = vector.load %arg4[%c0_7, %c0_8] : memref<8x128xf32, #tpu.memory_space<vmem>>, vector<8x128xf32>
    tpu.vector_store %arg4[%c0_7, %c0_8], %4 {strides = array<i32>} : memref<8x128xf32, #tpu.memory_space<vmem>>, vector<8x128xf32>,
    return
  }
  func.func @transform_0(%arg0: i32, %arg1: i32) -> (i32, i32) {
    %c0_i32 = arith.constant 0 : i32
    %c0_i32_0 = arith.constant 0 : i32
    %c0_i32_1 = arith.constant 0 : i32
    return %c0_i32, %c0_i32_0 : i32, i32
  }
  func.func @transform_1(%arg0: i32, %arg1: i32) -> (i32, i32) {
    %c0_i32 = arith.constant 0 : i32
    %c0_i32_0 = arith.constant 0 : i32
    %c0_i32_1 = arith.constant 0 : i32
    return %c0_i32, %c0_i32_0 : i32, i32
  }
  func.func @transform_2(%arg0: i32, %arg1: i32) -> (i32, i32) {
    %c0_i32 = arith.constant 0 : i32
    %c0_i32_0 = arith.constant 0 : i32
    %c0_i32_1 = arith.constant 0 : i32
    return %c0_i32, %c0_i32_0 : i32, i32
  }
}

module attributes {stable_mosaic.version = 11 : i64} {
  func.func @ffn_kernel(%arg0: i32, %arg1: i32, %arg2: memref<128x128xf32, #tpu.memory_space<vmem>>, %arg3: memref<128x256xbf16, #tpu.memory_space<vmem>>, %arg4: memref<256x128xbf16, #tpu.memory_space<vmem>>, %arg5: memref<1x128xf32, #tpu.memory_space<vmem>>, %arg6: memref<1x128xf32, #tpu.memory_space<vmem>>, %arg7: memref<128x128xf32, #tpu.memory_space<vmem>>, %arg8: memref<128x128xf32, #tpu.memory_space<vmem>>) attributes {dimension_semantics = [#tpu.dimension_semantics<parallel>, #tpu.dimension_semantics<arbitrary>], iteration_bounds = array<i64: 2, 1>, scalar_prefetch = 0 : i64, scratch_operands = 1 : i64, tpu.core_type = #tpu.core_type<tc>, window_params = [{transform_indices = @transform_0, window_bounds = array<i64: 128, 128>}, {pipeline_mode = #tpu.pipeline_mode<synchronous>, transform_indices = @transform_1, window_bounds = array<i64: 128, 256>}, {pipeline_mode = #tpu.pipeline_mode<synchronous>, transform_indices = @transform_2, window_bounds = array<i64: 256, 128>}, {pipeline_mode = #tpu.pipeline_mode<synchronous>, transform_indices = @transform_3, window_bounds = array<i64: 1, 128>}, {pipeline_mode = #tpu.pipeline_mode<synchronous>, transform_indices = @transform_4, window_bounds = array<i64: 1, 128>}, {transform_indices = @transform_5, window_bounds = array<i64: 128, 128>}]} {
    %c0_i32 = arith.constant 0 : i32
    %0 = arith.cmpi eq, %arg1, %c0_i32 : i32
    %1 = arith.extui %0 : i1 to i32
    %c0_i32_0 = arith.constant 0 : i32
    %2 = arith.cmpi ne, %1, %c0_i32_0 : i32
    scf.if %2 {
      %cst_14 = arith.constant 0.000000e+00 : f32
      %18 = vector.broadcast %cst_14 : f32 to vector<128x128xf32>
      %c0_15 = arith.constant 0 : index
      %c0_16 = arith.constant 0 : index
      %19 = vector.load %arg8[%c0_15, %c0_16] : memref<128x128xf32, #tpu.memory_space<vmem>>, vector<128x128xf32>
      tpu.vector_store %arg8[%c0_15, %c0_16], %18 {strides = array<i32>} : memref<128x128xf32, #tpu.memory_space<vmem>>, vector<128x128xf32>,
    } else {
    }
    %c0 = arith.constant 0 : index
    %c0_1 = arith.constant 0 : index
    %3 = vector.load %arg2[%c0, %c0_1] : memref<128x128xf32, #tpu.memory_space<vmem>>, vector<128x128xf32>
    %4 = arith.truncf %3 : vector<128x128xf32> to vector<128x128xbf16>
    %c0_2 = arith.constant 0 : index
    %c0_3 = arith.constant 0 : index
    %5 = vector.load %arg3[%c0_2, %c0_3] : memref<128x256xbf16, #tpu.memory_space<vmem>>, vector<128x256xbf16>
    %cst = arith.constant dense<0.000000e+00> : vector<128x256xf32>
    %6 = tpu.matmul %4, %5, %cst {dimension_numbers = #tpu.dot_dimension_numbers<[1], [0], [0], [1], [0, 0, 1, 1], [], []>} : vector<128x128xbf16>, vector<128x256xbf16>, vector<128x256xf32> -> vector<128x256xf32>
    %cst_4 = arith.constant 0.000000e+00 : f32
    %7 = vector.broadcast %cst_4 : f32 to vector<128x256xf32>
    %8 = arith.maximumf %6, %7 : vector<128x256xf32>
    %c0_5 = arith.constant 0 : index
    %c0_6 = arith.constant 0 : index
    %9 = vector.load %arg8[%c0_5, %c0_6] : memref<128x128xf32, #tpu.memory_space<vmem>>, vector<128x128xf32>
    %10 = arith.truncf %8 : vector<128x256xf32> to vector<128x256xbf16>
    %c0_7 = arith.constant 0 : index
    %c0_8 = arith.constant 0 : index
    %11 = vector.load %arg4[%c0_7, %c0_8] : memref<256x128xbf16, #tpu.memory_space<vmem>>, vector<256x128xbf16>
    %cst_9 = arith.constant dense<0.000000e+00> : vector<128x128xf32>
    %12 = tpu.matmul %10, %11, %cst_9 {dimension_numbers = #tpu.dot_dimension_numbers<[1], [0], [0], [1], [0, 0, 1, 1], [], []>} : vector<128x256xbf16>, vector<256x128xbf16>, vector<128x128xf32> -> vector<128x128xf32>
    %13 = arith.addf %9, %12 : vector<128x128xf32>
    %c0_10 = arith.constant 0 : index
    %c0_11 = arith.constant 0 : index
    %14 = vector.load %arg8[%c0_10, %c0_11] : memref<128x128xf32, #tpu.memory_space<vmem>>, vector<128x128xf32>
    tpu.vector_store %arg8[%c0_10, %c0_11], %13 {strides = array<i32>} : memref<128x128xf32, #tpu.memory_space<vmem>>, vector<128x128xf32>,
    %c0_i32_12 = arith.constant 0 : i32
    %15 = arith.cmpi eq, %arg1, %c0_i32_12 : i32
    %16 = arith.extui %15 : i1 to i32
    %c0_i32_13 = arith.constant 0 : i32
    %17 = arith.cmpi ne, %16, %c0_i32_13 : i32
    scf.if %17 {
      %c0_14 = arith.constant 0 : index
      %c0_15 = arith.constant 0 : index
      %18 = vector.load %arg8[%c0_14, %c0_15] : memref<128x128xf32, #tpu.memory_space<vmem>>, vector<128x128xf32>
      %19 = arith.addf %18, %3 : vector<128x128xf32>
      %cst_16 = arith.constant dense<0.000000e+00> : vector<128xf32>
      %20 = vector.multi_reduction <add>, %19, %cst_16 [1] : vector<128x128xf32> to vector<128xf32>
      %21 = vector.shape_cast %20 : vector<128xf32> to vector<128x1xf32>
      %cst_17 = arith.constant 7.812500e-03 : f32
      %22 = vector.broadcast %cst_17 : f32 to vector<128x1xf32>
      %23 = arith.mulf %21, %22 : vector<128x1xf32>
      %24 = vector.broadcast %23 : vector<128x1xf32> to vector<128x128xf32>
      %25 = arith.subf %19, %24 : vector<128x128xf32>
      %26 = arith.mulf %25, %25 : vector<128x128xf32>
      %cst_18 = arith.constant dense<0.000000e+00> : vector<128xf32>
      %27 = vector.multi_reduction <add>, %26, %cst_18 [1] : vector<128x128xf32> to vector<128xf32>
      %28 = vector.shape_cast %27 : vector<128xf32> to vector<128x1xf32>
      %cst_19 = arith.constant 7.812500e-03 : f32
      %29 = vector.broadcast %cst_19 : f32 to vector<128x1xf32>
      %30 = arith.mulf %28, %29 : vector<128x1xf32>
      %cst_20 = arith.constant 9.99999974E-6 : f32
      %31 = vector.broadcast %cst_20 : f32 to vector<128x1xf32>
      %32 = arith.addf %30, %31 : vector<128x1xf32>
      %33 = math.rsqrt %32 : vector<128x1xf32>
      %34 = vector.broadcast %33 : vector<128x1xf32> to vector<128x128xf32>
      %35 = arith.mulf %25, %34 : vector<128x128xf32>
      %c0_21 = arith.constant 0 : index
      %c0_22 = arith.constant 0 : index
      %36 = vector.load %arg5[%c0_21, %c0_22] : memref<1x128xf32, #tpu.memory_space<vmem>>, vector<1x128xf32>
      %37 = vector.broadcast %36 : vector<1x128xf32> to vector<128x128xf32>
      %38 = arith.mulf %35, %37 : vector<128x128xf32>
      %c0_23 = arith.constant 0 : index
      %c0_24 = arith.constant 0 : index
      %39 = vector.load %arg6[%c0_23, %c0_24] : memref<1x128xf32, #tpu.memory_space<vmem>>, vector<1x128xf32>
      %40 = vector.broadcast %39 : vector<1x128xf32> to vector<128x128xf32>
      %41 = arith.addf %38, %40 : vector<128x128xf32>
      %c0_25 = arith.constant 0 : index
      %c0_26 = arith.constant 0 : index
      %42 = vector.load %arg7[%c0_25, %c0_26] : memref<128x128xf32, #tpu.memory_space<vmem>>, vector<128x128xf32>
      tpu.vector_store %arg7[%c0_25, %c0_26], %41 {strides = array<i32>} : memref<128x128xf32, #tpu.memory_space<vmem>>, vector<128x128xf32>,
    } else {
    }
    return
  }
  func.func @transform_0(%arg0: i32, %arg1: i32) -> (i32, i32) {
    %c0_i32 = arith.constant 0 : i32
    %c0_i32_0 = arith.constant 0 : i32
    return %arg0, %c0_i32 : i32, i32
  }
  func.func @transform_1(%arg0: i32, %arg1: i32) -> (i32, i32) {
    %c0_i32 = arith.constant 0 : i32
    %c0_i32_0 = arith.constant 0 : i32
    %c0_i32_1 = arith.constant 0 : i32
    return %c0_i32, %c0_i32_0 : i32, i32
  }
  func.func @transform_2(%arg0: i32, %arg1: i32) -> (i32, i32) {
    %c0_i32 = arith.constant 0 : i32
    %c0_i32_0 = arith.constant 0 : i32
    %c0_i32_1 = arith.constant 0 : i32
    return %c0_i32, %c0_i32_0 : i32, i32
  }
  func.func @transform_3(%arg0: i32, %arg1: i32) -> (i32, i32) {
    %c0_i32 = arith.constant 0 : i32
    %c0_i32_0 = arith.constant 0 : i32
    %c0_i32_1 = arith.constant 0 : i32
    return %c0_i32, %c0_i32_0 : i32, i32
  }
  func.func @transform_4(%arg0: i32, %arg1: i32) -> (i32, i32) {
    %c0_i32 = arith.constant 0 : i32
    %c0_i32_0 = arith.constant 0 : i32
    %c0_i32_1 = arith.constant 0 : i32
    return %c0_i32, %c0_i32_0 : i32, i32
  }
  func.func @transform_5(%arg0: i32, %arg1: i32) -> (i32, i32) {
    %c0_i32 = arith.constant 0 : i32
    %c0_i32_0 = arith.constant 0 : i32
    return %arg0, %c0_i32 : i32, i32
  }
}

</mosaic_0001>

<llo_original>
// kernel: tpu_custom_call.1
$region0: #{tpu_custom_call.1}
  #allocation0 [shape = 'u32[]', space=smem, size = 0x4, offset = 0x4, fixed_abs, tag = 'smem constant byte address 0x4 - core index']
  #allocation1 [shape = 'u32[144,128]{1,0:T(1,128)}', space=vmem, size = 0x12000, scoped, tag = 'internal scratch']
  #allocation2 [shape = 'f32[8,128]{1,0:T(8,128)}', space=vmem, size = 0x1000, scoped, tag = 'scratch operand']
  %s0 = inlined_call_operand.hbm [shape: f32[8,128], index: 0, kind: input, shape index: {}]
  %s1 = inlined_call_operand.hbm [shape: f32[8,128], index: 1, kind: input, shape index: {}]
  %s2 = inlined_call_operand.hbm [shape: f32[8,128], index: 2, kind: output, shape index: {}]
  %s3 = sld [smem:[#allocation0]]
  $region26: #{tpu_custom_call.1} parent=0
    _
  %s5 = ssub.s32 1, %s3
  %s6 = scalar_select 0, %s5, %s3
  $region1: #{tpu_custom_call.1} parent=0
    #allocation3 [shape = 'u8[4096]{0}', space=vmem, size = 0x1000, scoped, tag = 'input window, operand 0, single buffered']
    #allocation4 [shape = 's32[1]{0}', space=sflag, size = 0x4, scoped, tag = 'scoped memory for tpu_custom_call.1']
    #allocation5 [shape = 's32[1]{0}', space=sflag, size = 0x4, scoped, tag = 'scoped memory for tpu_custom_call.1']
    #allocation6 [shape = 'u8[4096]{0}', space=vmem, size = 0x1000, scoped, tag = 'input window, operand 1, single buffered']
    #allocation7 [shape = 's32[1]{0}', space=sflag, size = 0x4, scoped, tag = 'scoped memory for tpu_custom_call.1']
    #allocation8 [shape = 'u8[4096]{0}', space=vmem, size = 0x1000, scoped, tag = 'output window, operand 0, single buffered']
    %7 = vsyncpa [#allocation4], 0
    %8 = vsyncpa [#allocation7], 0
    %9 = vsyncpa [#allocation5], 0
    // Predicated region
    $region2: #{tpu_custom_call.1} parent=1 // pred_check
      _
    $region3: #{tpu_custom_call.1} parent=1 // pred_check_branch
      %11 = sbr.rel (0) target = $region5
    $region4: #{tpu_custom_call.1} parent=1 // pred_region
      %s13 = ssub.s32 128, 128
      %14 = vsyncadd [#allocation4], %s13
      %s16 = sshll.u32 [#allocation3], 4
      %s17 = int_to_ptr.vmem [resolvable:$true] %s16
      %19 = dma.hbm_to_vmem [thread:$0]  %s0, 128, %s17, [#allocation4]
    $region5: #{tpu_custom_call.1} parent=1 // pred_fallthru
      _
    // Predicated region
    $region6: #{tpu_custom_call.1} parent=1 // pred_check
      _
    $region7: #{tpu_custom_call.1} parent=1 // pred_check_branch
      %21 = sbr.rel (0) target = $region9
    $region8: #{tpu_custom_call.1} parent=1 // pred_region
      %s23 = ssub.s32 128, 128
      %24 = vsyncadd [#allocation7], %s23
      %s26 = sshll.u32 [#allocation6], 4
      %s27 = int_to_ptr.vmem [resolvable:$true] %s26
      %29 = dma.hbm_to_vmem [thread:$0]  %s1, 128, %s27, [#allocation7]
    $region9: #{tpu_custom_call.1} parent=1 // pred_fallthru
      _
    // Predicated region
    $region10: #{tpu_custom_call.1} parent=1 // pred_check
      _
    $region11: #{tpu_custom_call.1} parent=1 // pred_check_branch
      %31 = sbr.rel (0) target = $region13
    $region12: #{tpu_custom_call.1} parent=1 // pred_region
      %32 = dma.done [#allocation4], 128
    $region13: #{tpu_custom_call.1} parent=1 // pred_fallthru
      _
    // Predicated region
    $region14: #{tpu_custom_call.1} parent=1 // pred_check
      _
    $region15: #{tpu_custom_call.1} parent=1 // pred_check_branch
      %34 = sbr.rel (0) target = $region17
    $region16: #{tpu_custom_call.1} parent=1 // pred_region
      %35 = dma.done [#allocation7], 128
    $region17: #{tpu_custom_call.1} parent=1 // pred_fallthru
      _
    %v36 = vld [vmem:[#allocation3] sm:$0xff]
    %v37 = vld [vmem:[#allocation6] sm:$0xff]
    %v38 = vadd.f32 %v36, %v37
    %39 = vst [vmem:[#allocation2] sm:$0xff] %v38
    %v40 = vld [vmem:[#allocation2] sm:$0xff]
    %41 = vst [vmem:[#allocation8] sm:$0xff] %v40
    // Predicated region
    $region18: #{tpu_custom_call.1} parent=1 // pred_check
      _
    $region19: #{tpu_custom_call.1} parent=1 // pred_check_branch
      %43 = sbr.rel (0) target = $region21
    $region20: #{tpu_custom_call.1} parent=1 // pred_region
      %s45 = ssub.s32 128, 128
      %46 = vsyncadd [#allocation5], %s45
      %s48 = sshll.u32 [#allocation8], 4
      %s49 = int_to_ptr.vmem [resolvable:$true] %s48
      %51 = dma.vmem_to_hbm [thread:$0]  %s49, 128, %s2, [#allocation5]
    $region21: #{tpu_custom_call.1} parent=1 // pred_fallthru
      _
    // Predicated region
    $region22: #{tpu_custom_call.1} parent=1 // pred_check
      _
    $region23: #{tpu_custom_call.1} parent=1 // pred_check_branch
      %53 = sbr.rel (0) target = $region25
    $region24: #{tpu_custom_call.1} parent=1 // pred_region
      %54 = dma.done [#allocation5], 128
    $region25: #{tpu_custom_call.1} parent=1 // pred_fallthru
      _
    %55 = vsyncpa [#allocation4], 1
    %56 = vsyncpa [#allocation7], 1
    %57 = vsyncpa [#allocation5], 1

// kernel: tpu_custom_call.1
$region0: #{tpu_custom_call.1}
  #allocation0 [shape = 'u32[]', space=smem, size = 0x4, offset = 0x4, fixed_abs, tag = 'smem constant byte address 0x4 - core index']
  #allocation1 [shape = 'u32[144,128]{1,0:T(1,128)}', space=vmem, size = 0x12000, scoped, tag = 'internal scratch']
  #allocation2 [shape = 'f32[128,128]{1,0:T(8,128)}', space=vmem, size = 0x10000, scoped, tag = 'scratch operand']
  %s0 = inlined_call_operand.hbm [shape: f32[256,128], index: 0, kind: input, shape index: {}]
  %s1 = inlined_call_operand.hbm [shape: bf16[128,256], index: 1, kind: input, shape index: {}]
  %s2 = inlined_call_operand.hbm [shape: bf16[256,128], index: 2, kind: input, shape index: {}]
  %s3 = inlined_call_operand.vmem [shape: f32[1,128], index: 3, kind: input, shape index: {}]
  %s4 = inlined_call_operand.vmem [shape: f32[1,128], index: 4, kind: input, shape index: {}]
  %s5 = inlined_call_operand.hbm [shape: f32[256,128], index: 5, kind: output, shape index: {}]
  %s6 = sld [smem:[#allocation0]]
  $region73: #{tpu_custom_call.1} parent=0
    _
  %s8 = ssub.s32 1, %s6
  %s9 = scalar_select 0, %s8, %s6
  $region1: #{tpu_custom_call.1} parent=0
    #allocation3 [shape = 'u8[131072]{0}', space=vmem, size = 0x20000, scoped, tag = 'input window, operand 0']
    #allocation4 [shape = 's32[2]{0}', space=sflag, size = 0x8, scoped, tag = 'scoped memory for tpu_custom_call.1']
    #allocation5 [shape = 's32[2]{0}', space=sflag, size = 0x8, scoped, tag = 'scoped memory for tpu_custom_call.1']
    #allocation6 [shape = 'u8[65536]{0}', space=vmem, size = 0x10000, scoped, tag = 'input window, operand 1, single buffered']
    #allocation7 [shape = 's32[1]{0}', space=sflag, size = 0x4, scoped, tag = 'scoped memory for tpu_custom_call.1']
    #allocation8 [shape = 'u8[65536]{0}', space=vmem, size = 0x10000, scoped, tag = 'input window, operand 2, single buffered']
    #allocation9 [shape = 'u8[131072]{0}', space=vmem, size = 0x20000, scoped, tag = 'output window, operand 0']
    %10 = vsyncpa [#allocation4], 0
    %s11 = scalar_lea.sflag [#allocation4], 1
    %12 = vsyncpa %s11, 0
    %13 = vsyncpa [#allocation7], 0
    %14 = vsyncpa [#allocation5], 0
    %s15 = scalar_lea.sflag [#allocation5], 1
    %16 = vsyncpa %s15, 0
    loop: start=0, step=1, limit=4
    $region2: #{tpu_custom_call.1} parent=1 // loop_pre_header
      _
    $region3: #{tpu_custom_call.1} parent=1 // loop_header
      %s18 = sphi 0, %s22
      %p19 = scmp.ge.s32.totalorder %s18, 4
      %s25 = sphi 0, %s37
      %s26 = sphi 0, %s33
      %s27 = sphi 0, %s25
      %s28 = sphi 0, %s26
      %s29 = sphi 0, %s27
      %s30 = sphi 0, %s28
      %s40 = sphi 0, %s42
      %s43 = sphi 0, %s40
      %s44 = sphi 0, %s43
      %s60 = sphi 0, %s44
      %s64 = sphi 0, %s64
      %s66 = sphi 0, %s64
      %s67 = sphi 0, %s66
      %s81 = sphi 0, %s67
      %s85 = sphi 0, %s85
      %s87 = sphi 0, %s85
      %s88 = sphi 0, %s87
      %s102 = sphi 0, %s88
      %s106 = sphi 0, %s106
      %s108 = sphi 0, %s106
      %s109 = sphi 0, %s108
      %s123 = sphi 0, %s109
      %s127 = sphi 0, %s127
      %s129 = sphi 0, %s127
      %s130 = sphi 0, %s129
      %s144 = sphi 0, %s130
      %s150 = sphi 0, %s152
      %s153 = sphi 0, %s150
      %s154 = sphi 0, %s153
      %s170 = sphi 0, %s154
    $region4: #{tpu_custom_call.1} parent=1 // loop_header_branch
      %21 = sbr.rel (%p19) target = $region8
    $region5: #{tpu_custom_call.1} parent=1 // loop_body
      %s23 = ssub.s32 %s18, 1
      %s24 = ssub.s32 %s18, 2
      %s31 = sadd.s32 1, %s26
      %p32 = scmp.ge.s32.totalorder %s31, 1
      %s33 = scalar_select %p32, 0, %s31
      %s34 = sadd.s32 1, %s25
      %s35 = scalar_select %p32, %s34, %s25
      %p36 = scmp.ge.s32.totalorder %s35, 2
      %s37 = scalar_select %p36, 0, %s35
      %s38 = ssub.s32 %s25, %s37
      %p39 = scmp.eq.s32.totalorder %s38, 0
      %s41 = sadd.s32 %s40, 1
      %s42 = scalar_select %p39, %s40, %s41
      %p45 = pneg %p39
      %p46 = scmp.eq.s32.totalorder %s18, 1
      %p47 = por %p45, %p46
      %p48 = scmp.ne.s32.totalorder %s40, %s43
      %p49 = scmp.eq.s32.totalorder %s18, 0
      %p50 = por %p48, %p49
      %p51 = scmp.ne.s32.totalorder %s40, %s43
      %p52 = scmp.eq.s32.totalorder %s23, 1
      %p53 = por %p51, %p52
      %p54 = scmp.ne.s32.totalorder %s43, %s44
      %p55 = scmp.eq.s32.totalorder %s23, 0
      %p56 = por %p54, %p55
      %p57 = scmp.ne.s32.totalorder %s43, %s44
      %p58 = scmp.eq.s32.totalorder %s24, 1
      %p59 = por %p57, %p58
      %p61 = scmp.ne.s32.totalorder %s44, %s60
      %p62 = scmp.eq.s32.totalorder %s24, 0
      %p63 = por %p61, %p62
      %s65 = sadd.s32 %s64, 1
      %p68 = scmp.eq.s32.totalorder %s18, 1
      %p69 = scmp.ne.s32.totalorder %s64, %s66
      %p70 = scmp.eq.s32.totalorder %s18, 0
      %p71 = por %p69, %p70
      %p72 = scmp.ne.s32.totalorder %s64, %s66
      %p73 = scmp.eq.s32.totalorder %s23, 1
      %p74 = por %p72, %p73
      %p75 = scmp.ne.s32.totalorder %s66, %s67
      %p76 = scmp.eq.s32.totalorder %s23, 0
      %p77 = por %p75, %p76
      %p78 = scmp.ne.s32.totalorder %s66, %s67
      %p79 = scmp.eq.s32.totalorder %s24, 1
      %p80 = por %p78, %p79
      %p82 = scmp.ne.s32.totalorder %s67, %s81
      %p83 = scmp.eq.s32.totalorder %s24, 0
      %p84 = por %p82, %p83
      %s86 = sadd.s32 %s85, 1
      %p89 = scmp.eq.s32.totalorder %s18, 1
      %p90 = scmp.ne.s32.totalorder %s85, %s87
      %p91 = scmp.eq.s32.totalorder %s18, 0
      %p92 = por %p90, %p91
      %p93 = scmp.ne.s32.totalorder %s85, %s87
      %p94 = scmp.eq.s32.totalorder %s23, 1
      %p95 = por %p93, %p94
      %p96 = scmp.ne.s32.totalorder %s87, %s88
      %p97 = scmp.eq.s32.totalorder %s23, 0
      %p98 = por %p96, %p97
      %p99 = scmp.ne.s32.totalorder %s87, %s88
      %p100 = scmp.eq.s32.totalorder %s24, 1
      %p101 = por %p99, %p100
      %p103 = scmp.ne.s32.totalorder %s88, %s102
      %p104 = scmp.eq.s32.totalorder %s24, 0
      %p105 = por %p103, %p104
      %s107 = sadd.s32 %s106, 1
      %p110 = scmp.eq.s32.totalorder %s18, 1
      %p111 = scmp.ne.s32.totalorder %s106, %s108
      %p112 = scmp.eq.s32.totalorder %s18, 0
      %p113 = por %p111, %p112
      %p114 = scmp.ne.s32.totalorder %s106, %s108
      %p115 = scmp.eq.s32.totalorder %s23, 1
      %p116 = por %p114, %p115
      %p117 = scmp.ne.s32.totalorder %s108, %s109
      %p118 = scmp.eq.s32.totalorder %s23, 0
      %p119 = por %p117, %p118
      %p120 = scmp.ne.s32.totalorder %s108, %s109
      %p121 = scmp.eq.s32.totalorder %s24, 1
      %p122 = por %p120, %p121
      %p124 = scmp.ne.s32.totalorder %s109, %s123
      %p125 = scmp.eq.s32.totalorder %s24, 0
      %p126 = por %p124, %p125
      %s128 = sadd.s32 %s127, 1
      %p131 = scmp.eq.s32.totalorder %s18, 1
      %p132 = scmp.ne.s32.totalorder %s127, %s129
      %p133 = scmp.eq.s32.totalorder %s18, 0
      %p134 = por %p132, %p133
      %p135 = scmp.ne.s32.totalorder %s127, %s129
      %p136 = scmp.eq.s32.totalorder %s23, 1
      %p137 = por %p135, %p136
      %p138 = scmp.ne.s32.totalorder %s129, %s130
      %p139 = scmp.eq.s32.totalorder %s23, 0
      %p140 = por %p138, %p139
      %p141 = scmp.ne.s32.totalorder %s129, %s130
      %p142 = scmp.eq.s32.totalorder %s24, 1
      %p143 = por %p141, %p142
      %p145 = scmp.ne.s32.totalorder %s130, %s144
      %p146 = scmp.eq.s32.totalorder %s24, 0
      %p147 = por %p145, %p146
      %s148 = ssub.s32 %s25, %s37
      %p149 = scmp.eq.s32.totalorder %s148, 0
      %s151 = sadd.s32 %s150, 1
      %s152 = scalar_select %p149, %s150, %s151
      %p155 = pneg %p149
      %p156 = scmp.eq.s32.totalorder %s18, 1
      %p157 = por %p155, %p156
      %p158 = scmp.ne.s32.totalorder %s150, %s153
      %p159 = scmp.eq.s32.totalorder %s18, 0
      %p160 = por %p158, %p159
      %p161 = scmp.ne.s32.totalorder %s150, %s153
      %p162 = scmp.eq.s32.totalorder %s23, 1
      %p163 = por %p161, %p162
      %p164 = scmp.ne.s32.totalorder %s153, %s154
      %p165 = scmp.eq.s32.totalorder %s23, 0
      %p166 = por %p164, %p165
      %p167 = scmp.ne.s32.totalorder %s153, %s154
      %p168 = scmp.eq.s32.totalorder %s24, 1
      %p169 = por %p167, %p168
      %p171 = scmp.ne.s32.totalorder %s154, %s170
      %p172 = scmp.eq.s32.totalorder %s24, 0
      %p173 = por %p171, %p172
      %p174 = scmp.le.s32.totalorder 1, %s18
      %p175 = scmp.lt.s32.totalorder %s18, 3
      %p176 = pnand %p174, %p175
      %p177 = pneg %p176
      // Predicated region
      $region9: #{tpu_custom_call.1} parent=5 // pred_check
        _
      $region10: #{tpu_custom_call.1} parent=5 // pred_check_branch
        %179 = sbr.rel (%p176) target = $region12
      $region11: #{tpu_custom_call.1} parent=5 // pred_region
        %s180 = ssub.s32 %s18, 1
        // Predicated region
        $region13: #{tpu_custom_call.1} parent=11 // pred_check
          %p181 = pneg %p77
        $region14: #{tpu_custom_call.1} parent=11 // pred_check_branch
          %183 = sbr.rel (%p181) target = $region16
        $region15: #{tpu_custom_call.1} parent=11 // pred_region
          %s185 = ssub.s32 2048, 2048
          %186 = vsyncadd [#allocation7], %s185
          %s187 = sshll.u32 [#allocation6], 4
          %s188 = int_to_ptr.vmem [resolvable:$true] %s187
          %193 = dma.hbm_to_vmem [thread:$0]  %s1, 2048, %s188, [#allocation7], 128, 128, 8
        $region16: #{tpu_custom_call.1} parent=11 // pred_fallthru
          _
        // Predicated region
        $region17: #{tpu_custom_call.1} parent=11 // pred_check
          %p194 = pneg %p98
        $region18: #{tpu_custom_call.1} parent=11 // pred_check_branch
          %196 = sbr.rel (%p194) target = $region20
        $region19: #{tpu_custom_call.1} parent=11 // pred_region
          %s198 = ssub.s32 2048, 2048
          %199 = vsyncadd [#allocation7], %s198
          %s200 = sshll.u32 [#allocation8], 4
          %s201 = int_to_ptr.vmem [resolvable:$true] %s200
          %206 = dma.hbm_to_vmem [thread:$0]  %s2, 2048, %s201, [#allocation7], 64, 64, 4
        $region20: #{tpu_custom_call.1} parent=11 // pred_fallthru
          _
        // Predicated region
        $region21: #{tpu_custom_call.1} parent=11 // pred_check
          %p207 = pneg %p119
        $region22: #{tpu_custom_call.1} parent=11 // pred_check_branch
          %209 = sbr.rel (%p207) target = $region24
        $region23: #{tpu_custom_call.1} parent=11 // pred_region
          _
        $region24: #{tpu_custom_call.1} parent=11 // pred_fallthru
          _
        // Predicated region
        $region25: #{tpu_custom_call.1} parent=11 // pred_check
          %p210 = pneg %p140
        $region26: #{tpu_custom_call.1} parent=11 // pred_check_branch
          %212 = sbr.rel (%p210) target = $region28
        $region27: #{tpu_custom_call.1} parent=11 // pred_region
          _
        $region28: #{tpu_custom_call.1} parent=11 // pred_fallthru
          _
      $region12: #{tpu_custom_call.1} parent=5 // pred_fallthru
        _
      %p213 = scmp.lt.s32.totalorder %s18, 2
      // Predicated region
      $region29: #{tpu_custom_call.1} parent=5 // pred_check
        %p214 = pneg %p213
      $region30: #{tpu_custom_call.1} parent=5 // pred_check_branch
        %216 = sbr.rel (%p214) target = $region32
      $region31: #{tpu_custom_call.1} parent=5 // pred_region
        // Predicated region
        $region33: #{tpu_custom_call.1} parent=31 // pred_check
          %p217 = pneg %p50
        $region34: #{tpu_custom_call.1} parent=31 // pred_check_branch
          %219 = sbr.rel (%p217) target = $region36
        $region35: #{tpu_custom_call.1} parent=31 // pred_region
          %s220 = sand.u32 %s40, 1
          %s221 = scalar_lea.sflag [#allocation4], %s220
          %s222 = sand.u32 %s40, 1
          %s223 = smul.addr %s222, 128
          %s224 = scalar_lea.vmem [#allocation3], %s223
          %s225 = smul.u32 16, %s25
          %s227 = ssub.s32 2048, 2048
          %228 = vsyncadd %s221, %s227
          %s229 = smul.addr %s225, 128
          %s230 = scalar_lea.hbm %s0, %s229
          %s231 = sshll.u32 %s224, 4
          %s232 = int_to_ptr.vmem [resolvable:$true] %s231
          %237 = dma.hbm_to_vmem [thread:$0]  %s230, 2048, %s232, %s221, 128, 128, 8
        $region36: #{tpu_custom_call.1} parent=31 // pred_fallthru
          _
      $region32: #{tpu_custom_call.1} parent=5 // pred_fallthru
        _
      %p238 = scmp.le.s32.totalorder 1, %s18
      %p239 = scmp.lt.s32.totalorder %s18, 3
      %p240 = pnand %p238, %p239
      %p241 = pneg %p240
      // Predicated region
      $region37: #{tpu_custom_call.1} parent=5 // pred_check
        _
      $region38: #{tpu_custom_call.1} parent=5 // pred_check_branch
        %243 = sbr.rel (%p240) target = $region40
      $region39: #{tpu_custom_call.1} parent=5 // pred_region
        %s244 = ssub.s32 %s18, 1
        %s245 = sand.u32 %s43, 1
        %s246 = scalar_lea.sflag [#allocation4], %s245
        %s247 = sand.u32 %s43, 1
        %s248 = smul.addr %s247, 128
        %s249 = scalar_lea.vmem [#allocation3], %s248
        // Predicated region
        $region41: #{tpu_custom_call.1} parent=39 // pred_check
          %p250 = pneg %p56
        $region42: #{tpu_custom_call.1} parent=39 // pred_check_branch
          %252 = sbr.rel (%p250) target = $region44
        $region43: #{tpu_custom_call.1} parent=39 // pred_region
          %253 = dma.done %s246, 2048
        $region44: #{tpu_custom_call.1} parent=39 // pred_fallthru
          _
        // Predicated region
        $region45: #{tpu_custom_call.1} parent=39 // pred_check
          %p254 = pneg %p77
        $region46: #{tpu_custom_call.1} parent=39 // pred_check_branch
          %256 = sbr.rel (%p254) target = $region48
        $region47: #{tpu_custom_call.1} parent=39 // pred_region
          %257 = dma.done [#allocation7], 2048
        $region48: #{tpu_custom_call.1} parent=39 // pred_fallthru
          _
        // Predicated region
        $region49: #{tpu_custom_call.1} parent=39 // pred_check
          %p258 = pneg %p98
        $region50: #{tpu_custom_call.1} parent=39 // pred_check_branch
          %260 = sbr.rel (%p258) target = $region52
        $region51: #{tpu_custom_call.1} parent=39 // pred_region
          %261 = dma.done [#allocation7], 2048
        $region52: #{tpu_custom_call.1} parent=39 // pred_fallthru
          _
        %s262 = sand.u32 %s43, 1
        %s263 = scalar_lea.sflag [#allocation4], %s262
        %s264 = sand.u32 %s43, 1
        %s265 = smul.addr %s264, 128
        %s266 = scalar_lea.vmem [#allocation3], %s265
        %p267 = pneg %p56
        %p268 = pneg %p53
        %p269 = pneg %p77
        %p270 = pneg %p74
        %p271 = pneg %p98
        %p272 = pneg %p95
        %p273 = pneg %p119
        %p274 = pneg %p116
        %p275 = pneg %p140
        %p276 = pneg %p137
        %p277 = pneg %p166
        %p278 = pneg %p163
        %s279 = sand.u32 %s153, 1
        %s280 = scalar_lea.sflag [#allocation5], %s279
        %s281 = sand.u32 %s153, 1
        %s282 = smul.addr %s281, 128
        %s283 = scalar_lea.vmem [#allocation9], %s282
        %s284 = smul.u32 16, %s27
        %s285 = smul.u32 16, %s27
        %p287 = scmp.eq.s32.totalorder %s28, 0
        // Predicated region
        $region53: #{tpu_custom_call.1} parent=39 // pred_check
          %p288 = pneg %p287
        $region54: #{tpu_custom_call.1} parent=39 // pred_check_branch
          %290 = sbr.rel (%p288) target = $region56
        $region55: #{tpu_custom_call.1} parent=39 // pred_region
          %291 = vst [vmem:[#allocation2] sm:$0xff] 0.0
          %292 = vst [vmem:[#allocation2 + $0x8] sm:$0xff] 0.0
          %293 = vst [vmem:[#allocation2 + $0x10] sm:$0xff] 0.0
          %294 = vst [vmem:[#allocation2 + $0x18] sm:$0xff] 0.0
          %295 = vst [vmem:[#allocation2 + $0x20] sm:$0xff] 0.0
          %296 = vst [vmem:[#allocation2 + $0x28] sm:$0xff] 0.0
          %297 = vst [vmem:[#allocation2 + $0x30] sm:$0xff] 0.0
          %298 = vst [vmem:[#allocation2 + $0x38] sm:$0xff] 0.0
          %299 = vst [vmem:[#allocation2 + $0x40] sm:$0xff] 0.0
          %300 = vst [vmem:[#allocation2 + $0x48] sm:$0xff] 0.0
          %301 = vst [vmem:[#allocation2 + $0x50] sm:$0xff] 0.0
          %302 = vst [vmem:[#allocation2 + $0x58] sm:$0xff] 0.0
          %303 = vst [vmem:[#allocation2 + $0x60] sm:$0xff] 0.0
          %304 = vst [vmem:[#allocation2 + $0x68] sm:$0xff] 0.0
          %305 = vst [vmem:[#allocation2 + $0x70] sm:$0xff] 0.0
          %306 = vst [vmem:[#allocation2 + $0x78] sm:$0xff] 0.0
        $region56: #{tpu_custom_call.1} parent=39 // pred_fallthru
          _
        %v307 = vld [vmem:[%s249] sm:$0xff]
        %v308 = vld [vmem:[%s249 + $0x8] sm:$0xff]
        %v309 = vld [vmem:[%s249 + $0x10] sm:$0xff]
        %v310 = vld [vmem:[%s249 + $0x18] sm:$0xff]
        %v311 = vld [vmem:[%s249 + $0x20] sm:$0xff]
        %v312 = vld [vmem:[%s249 + $0x28] sm:$0xff]
        %v313 = vld [vmem:[%s249 + $0x30] sm:$0xff]
        %v314 = vld [vmem:[%s249 + $0x38] sm:$0xff]
        %v315 = vld [vmem:[%s249 + $0x40] sm:$0xff]
        %v316 = vld [vmem:[%s249 + $0x48] sm:$0xff]
        %v317 = vld [vmem:[%s249 + $0x50] sm:$0xff]
        %v318 = vld [vmem:[%s249 + $0x58] sm:$0xff]
        %v319 = vld [vmem:[%s249 + $0x60] sm:$0xff]
        %v320 = vld [vmem:[%s249 + $0x68] sm:$0xff]
        %v321 = vld [vmem:[%s249 + $0x70] sm:$0xff]
        %v322 = vld [vmem:[%s249 + $0x78] sm:$0xff]
        %v323 = vpack.c.bf16 %v308, %v307
        %v324 = vpack.c.bf16 %v310, %v309
        %v325 = vpack.c.bf16 %v312, %v311
        %v326 = vpack.c.bf16 %v314, %v313
        %v327 = vpack.c.bf16 %v316, %v315
        %v328 = vpack.c.bf16 %v318, %v317
        %v329 = vpack.c.bf16 %v320, %v319
        %v330 = vpack.c.bf16 %v322, %v321
        %v331 = vld [vmem:[#allocation6] sm:$0xff]
        %v332 = vld [vmem:[#allocation6 + $0x8] sm:$0xff]
        %v333 = vld [vmem:[#allocation6 + $0x10] sm:$0xff]
        %v334 = vld [vmem:[#allocation6 + $0x18] sm:$0xff]
        %v335 = vld [vmem:[#allocation6 + $0x20] sm:$0xff]
        %v336 = vld [vmem:[#allocation6 + $0x28] sm:$0xff]
        %v337 = vld [vmem:[#allocation6 + $0x30] sm:$0xff]
        %v338 = vld [vmem:[#allocation6 + $0x38] sm:$0xff]
        %v339 = vld [vmem:[#allocation6 + $0x40] sm:$0xff]
        %v340 = vld [vmem:[#allocation6 + $0x48] sm:$0xff]
        %v341 = vld [vmem:[#allocation6 + $0x50] sm:$0xff]
        %v342 = vld [vmem:[#allocation6 + $0x58] sm:$0xff]
        %v343 = vld [vmem:[#allocation6 + $0x60] sm:$0xff]
        %v344 = vld [vmem:[#allocation6 + $0x68] sm:$0xff]
        %v345 = vld [vmem:[#allocation6 + $0x70] sm:$0xff]
        %v346 = vld [vmem:[#allocation6 + $0x78] sm:$0xff]
        %v363 = vunpack.c.l.b16 %v331
        %v364 = vunpack.c.h.b16 %v331
        %v365 = vunpack.c.l.b16 %v332
        %v366 = vunpack.c.h.b16 %v332
        %v367 = vunpack.c.l.b16 %v333
        %v368 = vunpack.c.h.b16 %v333
        %v369 = vunpack.c.l.b16 %v334
        %v370 = vunpack.c.h.b16 %v334
        %v371 = vunpack.c.l.b16 %v335
        %v372 = vunpack.c.h.b16 %v335
        %v373 = vunpack.c.l.b16 %v336
        %v374 = vunpack.c.h.b16 %v336
        %v375 = vunpack.c.l.b16 %v337
        %v376 = vunpack.c.h.b16 %v337
        %v377 = vunpack.c.l.b16 %v338
        %v378 = vunpack.c.h.b16 %v338
        %v379 = vunpack.c.l.b16 %v339
        %v380 = vunpack.c.h.b16 %v339
        %v381 = vunpack.c.l.b16 %v340
        %v382 = vunpack.c.h.b16 %v340
        %v383 = vunpack.c.l.b16 %v341
        %v384 = vunpack.c.h.b16 %v341
        %v385 = vunpack.c.l.b16 %v342
        %v386 = vunpack.c.h.b16 %v342
        %v387 = vunpack.c.l.b16 %v343
        %v388 = vunpack.c.h.b16 %v343
        %v389 = vunpack.c.l.b16 %v344
        %v390 = vunpack.c.h.b16 %v344
        %v391 = vunpack.c.l.b16 %v345
        %v392 = vunpack.c.h.b16 %v345
        %v393 = vunpack.c.l.b16 %v346
        %v394 = vunpack.c.h.b16 %v346
        %v395 = vpack.c.b16 %v365, %v363
        %v396 = vpack.c.b16 %v366, %v364
        %v397 = vpack.c.b16 %v369, %v367
        %v398 = vpack.c.b16 %v370, %v368
        %v399 = vpack.c.b16 %v373, %v371
        %v400 = vpack.c.b16 %v374, %v372
        %v401 = vpack.c.b16 %v377, %v375
        %v402 = vpack.c.b16 %v378, %v376
        %v403 = vpack.c.b16 %v381, %v379
        %v404 = vpack.c.b16 %v382, %v380
        %v405 = vpack.c.b16 %v385, %v383
        %v406 = vpack.c.b16 %v386, %v384
        %v407 = vpack.c.b16 %v389, %v387
        %v408 = vpack.c.b16 %v390, %v388
        %v409 = vpack.c.b16 %v393, %v391
        %v410 = vpack.c.b16 %v394, %v392
        %427 = vmatprep.subr.bf16.mxu0 %v396
        %428 = vmatpush1.bf16.msra.mxu0 %v395
        %429 = vmatprep.subr.bf16.mxu0 %v398
        %430 = vmatpush1.bf16.msra.mxu0 %v397
        %431 = vmatprep.subr.bf16.mxu0 %v400
        %432 = vmatpush1.bf16.msra.mxu0 %v399
        %433 = vmatprep.subr.bf16.mxu0 %v402
        %434 = vmatpush1.bf16.msra.mxu0 %v401
        %435 = vmatprep.subr.bf16.mxu0 %v404
        %436 = vmatpush1.bf16.msra.mxu0 %v403
        %437 = vmatprep.subr.bf16.mxu0 %v406
        %438 = vmatpush1.bf16.msra.mxu0 %v405
        %439 = vmatprep.subr.bf16.mxu0 %v408
        %440 = vmatpush1.bf16.msra.mxu0 %v407
        %441 = vmatprep.subr.bf16.mxu0 %v410
        %442 = vmatpush1.bf16.msra.mxu0 %v409
        %443 = vmatprep.subr.bf16.mxu0 0
        %444 = vmatpush1.bf16.msra.mxu0 0
        %445 = vmatprep.subr.bf16.mxu0 0
        %446 = vmatpush1.bf16.msra.mxu0 0
        %447 = vmatprep.subr.bf16.mxu0 0
        %448 = vmatpush1.bf16.msra.mxu0 0
        %449 = vmatprep.subr.bf16.mxu0 0
        %450 = vmatpush1.bf16.msra.mxu0 0
        %451 = vmatprep.subr.bf16.mxu0 0
        %452 = vmatpush1.bf16.msra.mxu0 0
        %453 = vmatprep.subr.bf16.mxu0 0
        %454 = vmatpush1.bf16.msra.mxu0 0
        %455 = vmatprep.subr.bf16.mxu0 0
        %456 = vmatpush1.bf16.msra.mxu0 0
        %457 = vmatprep.subr.bf16.mxu0 0
        %458 = vmatpush1.bf16.msra.mxu0 0
        %459 = vmatprep.mubr.bf16.mxu0 0
        %460 = vmatmul.mubr.bf16.gmra.mrb[0].mxu0 %v323
        %v461 = vpop.f32.mrb[0].mxu0
        %v462 = vadd.f32 0.0, %v461
        %v463 = vpop.f32.mrb[0].mxu0
        %v464 = vadd.f32 0.0, %v463
        %v465 = vpop.f32.mrb[0].mxu0
        %v466 = vadd.f32 0.0, %v465
        %v467 = vpop.f32.mrb[0].mxu0
        %v468 = vadd.f32 0.0, %v467
        %469 = vmatprep.mubr.bf16.mxu0 0
        %470 = vmatmul.mubr.bf16.gmra.mrb[0].mxu0 %v324
        %v471 = vpop.f32.mrb[0].mxu0
        %v472 = vadd.f32 0.0, %v471
        %v473 = vpop.f32.mrb[0].mxu0
        %v474 = vadd.f32 0.0, %v473
        %v475 = vpop.f32.mrb[0].mxu0
        %v476 = vadd.f32 0.0, %v475
        %v477 = vpop.f32.mrb[0].mxu0
        %v478 = vadd.f32 0.0, %v477
        %479 = vmatprep.mubr.bf16.mxu0 0
        %480 = vmatmul.mubr.bf16.gmra.mrb[0].mxu0 %v325
        %v481 = vpop.f32.mrb[0].mxu0
        %v482 = vadd.f32 0.0, %v481
        %v483 = vpop.f32.mrb[0].mxu0
        %v484 = vadd.f32 0.0, %v483
        %v485 = vpop.f32.mrb[0].mxu0
        %v486 = vadd.f32 0.0, %v485
        %v487 = vpop.f32.mrb[0].mxu0
        %v488 = vadd.f32 0.0, %v487
        %489 = vmatprep.mubr.bf16.mxu0 0
        %490 = vmatmul.mubr.bf16.gmra.mrb[0].mxu0 %v326
        %v491 = vpop.f32.mrb[0].mxu0
        %v492 = vadd.f32 0.0, %v491
        %v493 = vpop.f32.mrb[0].mxu0
        %v494 = vadd.f32 0.0, %v493
        %v495 = vpop.f32.mrb[0].mxu0
        %v496 = vadd.f32 0.0, %v495
        %v497 = vpop.f32.mrb[0].mxu0
        %v498 = vadd.f32 0.0, %v497
        %499 = vmatprep.mubr.bf16.mxu0 0
        %500 = vmatmul.mubr.bf16.gmra.mrb[0].mxu0 %v327
        %v501 = vpop.f32.mrb[0].mxu0
        %v502 = vadd.f32 0.0, %v501
        %v503 = vpop.f32.mrb[0].mxu0
        %v504 = vadd.f32 0.0, %v503
        %v505 = vpop.f32.mrb[0].mxu0
        %v506 = vadd.f32 0.0, %v505
        %v507 = vpop.f32.mrb[0].mxu0
        %v508 = vadd.f32 0.0, %v507
        %509 = vmatprep.mubr.bf16.mxu0 0
        %510 = vmatmul.mubr.bf16.gmra.mrb[0].mxu0 %v328
        %v511 = vpop.f32.mrb[0].mxu0
        %v512 = vadd.f32 0.0, %v511
        %v513 = vpop.f32.mrb[0].mxu0
        %v514 = vadd.f32 0.0, %v513
        %v515 = vpop.f32.mrb[0].mxu0
        %v516 = vadd.f32 0.0, %v515
        %v517 = vpop.f32.mrb[0].mxu0
        %v518 = vadd.f32 0.0, %v517
        %519 = vmatprep.mubr.bf16.mxu0 0
        %520 = vmatmul.mubr.bf16.gmra.mrb[0].mxu0 %v329
        %v521 = vpop.f32.mrb[0].mxu0
        %v522 = vadd.f32 0.0, %v521
        %v523 = vpop.f32.mrb[0].mxu0
        %v524 = vadd.f32 0.0, %v523
        %v525 = vpop.f32.mrb[0].mxu0
        %v526 = vadd.f32 0.0, %v525
        %v527 = vpop.f32.mrb[0].mxu0
        %v528 = vadd.f32 0.0, %v527
        %529 = vmatprep.mubr.bf16.mxu0 0
        %530 = vmatmul.mubr.bf16.gmra.mrb[0].mxu0 %v330
        %v531 = vpop.f32.mrb[0].mxu0
        %v532 = vadd.f32 0.0, %v531
        %v533 = vpop.f32.mrb[0].mxu0
        %v534 = vadd.f32 0.0, %v533
        %v535 = vpop.f32.mrb[0].mxu0
        %v536 = vadd.f32 0.0, %v535
        %v537 = vpop.f32.mrb[0].mxu0
        %v538 = vadd.f32 0.0, %v537
        %539 = vdwg.mxu0
        %v540 = vmax.f32 %v462, 0.0
        %v541 = vmax.f32 %v464, 0.0
        %v542 = vmax.f32 %v466, 0.0
        %v543 = vmax.f32 %v468, 0.0
        %v544 = vmax.f32 %v472, 0.0
        %v545 = vmax.f32 %v474, 0.0
        %v546 = vmax.f32 %v476, 0.0
        %v547 = vmax.f32 %v478, 0.0
        %v548 = vmax.f32 %v482, 0.0
        %v549 = vmax.f32 %v484, 0.0
        %v550 = vmax.f32 %v486, 0.0
        %v551 = vmax.f32 %v488, 0.0
        %v552 = vmax.f32 %v492, 0.0
        %v553 = vmax.f32 %v494, 0.0
        %v554 = vmax.f32 %v496, 0.0
        %v555 = vmax.f32 %v498, 0.0
        %v556 = vmax.f32 %v502, 0.0
        %v557 = vmax.f32 %v504, 0.0
        %v558 = vmax.f32 %v506, 0.0
        %v559 = vmax.f32 %v508, 0.0
        %v560 = vmax.f32 %v512, 0.0
        %v561 = vmax.f32 %v514, 0.0
        %v562 = vmax.f32 %v516, 0.0
        %v563 = vmax.f32 %v518, 0.0
        %v564 = vmax.f32 %v522, 0.0
        %v565 = vmax.f32 %v524, 0.0
        %v566 = vmax.f32 %v526, 0.0
        %v567 = vmax.f32 %v528, 0.0
        %v568 = vmax.f32 %v532, 0.0
        %v569 = vmax.f32 %v534, 0.0
        %v570 = vmax.f32 %v536, 0.0
        %v571 = vmax.f32 %v538, 0.0
        %v572 = vld [vmem:[#allocation2] sm:$0xff]
        %v573 = vld [vmem:[#allocation2 + $0x8] sm:$0xff]
        %v574 = vld [vmem:[#allocation2 + $0x10] sm:$0xff]
        %v575 = vld [vmem:[#allocation2 + $0x18] sm:$0xff]
        %v576 = vld [vmem:[#allocation2 + $0x20] sm:$0xff]
        %v577 = vld [vmem:[#allocation2 + $0x28] sm:$0xff]
        %v578 = vld [vmem:[#allocation2 + $0x30] sm:$0xff]
        %v579 = vld [vmem:[#allocation2 + $0x38] sm:$0xff]
        %v580 = vld [vmem:[#allocation2 + $0x40] sm:$0xff]
        %v581 = vld [vmem:[#allocation2 + $0x48] sm:$0xff]
        %v582 = vld [vmem:[#allocation2 + $0x50] sm:$0xff]
        %v583 = vld [vmem:[#allocation2 + $0x58] sm:$0xff]
        %v584 = vld [vmem:[#allocation2 + $0x60] sm:$0xff]
        %v585 = vld [vmem:[#allocation2 + $0x68] sm:$0xff]
        %v586 = vld [vmem:[#allocation2 + $0x70] sm:$0xff]
        %v587 = vld [vmem:[#allocation2 + $0x78] sm:$0xff]
        %v588 = vpack.c.bf16 %v542, %v540
        %v589 = vpack.c.bf16 %v543, %v541
        %v590 = vpack.c.bf16 %v546, %v544
        %v591 = vpack.c.bf16 %v547, %v545
        %v592 = vpack.c.bf16 %v550, %v548
        %v593 = vpack.c.bf16 %v551, %v549
        %v594 = vpack.c.bf16 %v554, %v552
        %v595 = vpack.c.bf16 %v555, %v553
        %v596 = vpack.c.bf16 %v558, %v556
        %v597 = vpack.c.bf16 %v559, %v557
        %v598 = vpack.c.bf16 %v562, %v560
        %v599 = vpack.c.bf16 %v563, %v561
        %v600 = vpack.c.bf16 %v566, %v564
        %v601 = vpack.c.bf16 %v567, %v565
        %v602 = vpack.c.bf16 %v570, %v568
        %v603 = vpack.c.bf16 %v571, %v569
        %v604 = vld [vmem:[#allocation8] sm:$0xf]
        %v605 = vld [vmem:[#allocation8 + $0x4] sm:$0xf]
        %v606 = vld [vmem:[#allocation8 + $0x8] sm:$0xf]
        %v607 = vld [vmem:[#allocation8 + $0xc] sm:$0xf]
        %v608 = vld [vmem:[#allocation8 + $0x10] sm:$0xf]
        %v609 = vld [vmem:[#allocation8 + $0x14] sm:$0xf]
        %v610 = vld [vmem:[#allocation8 + $0x18] sm:$0xf]
        %v611 = vld [vmem:[#allocation8 + $0x1c] sm:$0xf]
        %v612 = vld [vmem:[#allocation8 + $0x20] sm:$0xf]
        %v613 = vld [vmem:[#allocation8 + $0x24] sm:$0xf]
        %v614 = vld [vmem:[#allocation8 + $0x28] sm:$0xf]
        %v615 = vld [vmem:[#allocation8 + $0x2c] sm:$0xf]
        %v616 = vld [vmem:[#allocation8 + $0x30] sm:$0xf]
        %v617 = vld [vmem:[#allocation8 + $0x34] sm:$0xf]
        %v618 = vld [vmem:[#allocation8 + $0x38] sm:$0xf]
        %v619 = vld [vmem:[#allocation8 + $0x3c] sm:$0xf]
        %v620 = vld [vmem:[#allocation8 + $0x40] sm:$0xf]
        %v621 = vld [vmem:[#allocation8 + $0x44] sm:$0xf]
        %v622 = vld [vmem:[#allocation8 + $0x48] sm:$0xf]
        %v623 = vld [vmem:[#allocation8 + $0x4c] sm:$0xf]
        %v624 = vld [vmem:[#allocation8 + $0x50] sm:$0xf]
        %v625 = vld [vmem:[#allocation8 + $0x54] sm:$0xf]
        %v626 = vld [vmem:[#allocation8 + $0x58] sm:$0xf]
        %v627 = vld [vmem:[#allocation8 + $0x5c] sm:$0xf]
        %v628 = vld [vmem:[#allocation8 + $0x60] sm:$0xf]
        %v629 = vld [vmem:[#allocation8 + $0x64] sm:$0xf]
        %v630 = vld [vmem:[#allocation8 + $0x68] sm:$0xf]
        %v631 = vld [vmem:[#allocation8 + $0x6c] sm:$0xf]
        %v632 = vld [vmem:[#allocation8 + $0x70] sm:$0xf]
        %v633 = vld [vmem:[#allocation8 + $0x74] sm:$0xf]
        %v634 = vld [vmem:[#allocation8 + $0x78] sm:$0xf]
        %v635 = vld [vmem:[#allocation8 + $0x7c] sm:$0xf]
        %v668 = vunpack.c.l.b16 %v604
        %v669 = vunpack.c.l.b16 %v605
        %v670 = vunpack.c.l.b16 %v606
        %v671 = vunpack.c.l.b16 %v607
        %v672 = vunpack.c.l.b16 %v608
        %v673 = vunpack.c.l.b16 %v609
        %v674 = vunpack.c.l.b16 %v610
        %v675 = vunpack.c.l.b16 %v611
        %v676 = vunpack.c.l.b16 %v612
        %v677 = vunpack.c.l.b16 %v613
        %v678 = vunpack.c.l.b16 %v614
        %v679 = vunpack.c.l.b16 %v615
        %v680 = vunpack.c.l.b16 %v616
        %v681 = vunpack.c.l.b16 %v617
        %v682 = vunpack.c.l.b16 %v618
        %v683 = vunpack.c.l.b16 %v619
        %v684 = vunpack.c.l.b16 %v620
        %v685 = vunpack.c.l.b16 %v621
        %v686 = vunpack.c.l.b16 %v622
        %v687 = vunpack.c.l.b16 %v623
        %v688 = vunpack.c.l.b16 %v624
        %v689 = vunpack.c.l.b16 %v625
        %v690 = vunpack.c.l.b16 %v626
        %v691 = vunpack.c.l.b16 %v627
        %v692 = vunpack.c.l.b16 %v628
        %v693 = vunpack.c.l.b16 %v629
        %v694 = vunpack.c.l.b16 %v630
        %v695 = vunpack.c.l.b16 %v631
        %v696 = vunpack.c.l.b16 %v632
        %v697 = vunpack.c.l.b16 %v633
        %v698 = vunpack.c.l.b16 %v634
        %v699 = vunpack.c.l.b16 %v635
        %v700 = vpack.c.b16 %v669, %v668
        %v701 = vpack.c.b16 %v671, %v670
        %v702 = vpack.c.b16 %v673, %v672
        %v703 = vpack.c.b16 %v675, %v674
        %v704 = vpack.c.b16 %v677, %v676
        %v705 = vpack.c.b16 %v679, %v678
        %v706 = vpack.c.b16 %v681, %v680
        %v707 = vpack.c.b16 %v683, %v682
        %v708 = vpack.c.b16 %v685, %v684
        %v709 = vpack.c.b16 %v687, %v686
        %v710 = vpack.c.b16 %v689, %v688
        %v711 = vpack.c.b16 %v691, %v690
        %v712 = vpack.c.b16 %v693, %v692
        %v713 = vpack.c.b16 %v695, %v694
        %v714 = vpack.c.b16 %v697, %v696
        %v715 = vpack.c.b16 %v699, %v698
        %732 = vmatprep.subr.bf16.mxu0 0
        %733 = vmatpush1.bf16.msra.mxu0 %v700
        %734 = vmatprep.subr.bf16.mxu0 0
        %735 = vmatpush1.bf16.msra.mxu0 %v701
        %736 = vmatprep.subr.bf16.mxu0 0
        %737 = vmatpush1.bf16.msra.mxu0 %v702
        %738 = vmatprep.subr.bf16.mxu0 0
        %739 = vmatpush1.bf16.msra.mxu0 %v703
        %740 = vmatprep.subr.bf16.mxu0 0
        %741 = vmatpush1.bf16.msra.mxu0 %v704
        %742 = vmatprep.subr.bf16.mxu0 0
        %743 = vmatpush1.bf16.msra.mxu0 %v705
        %744 = vmatprep.subr.bf16.mxu0 0
        %745 = vmatpush1.bf16.msra.mxu0 %v706
        %746 = vmatprep.subr.bf16.mxu0 0
        %747 = vmatpush1.bf16.msra.mxu0 %v707
        %748 = vmatprep.subr.bf16.mxu0 0
        %749 = vmatpush1.bf16.msra.mxu0 %v708
        %750 = vmatprep.subr.bf16.mxu0 0
        %751 = vmatpush1.bf16.msra.mxu0 %v709
        %752 = vmatprep.subr.bf16.mxu0 0
        %753 = vmatpush1.bf16.msra.mxu0 %v710
        %754 = vmatprep.subr.bf16.mxu0 0
        %755 = vmatpush1.bf16.msra.mxu0 %v711
        %756 = vmatprep.subr.bf16.mxu0 0
        %757 = vmatpush1.bf16.msra.mxu0 %v712
        %758 = vmatprep.subr.bf16.mxu0 0
        %759 = vmatpush1.bf16.msra.mxu0 %v713
        %760 = vmatprep.subr.bf16.mxu0 0
        %761 = vmatpush1.bf16.msra.mxu0 %v714
        %762 = vmatprep.subr.bf16.mxu0 0
        %763 = vmatpush1.bf16.msra.mxu0 %v715
        %764 = vmatprep.mubr.bf16.mxu0 %v589
        %765 = vmatmul.mubr.bf16.gmra.mrb[0].mxu0 %v588
        %v766 = vpop.f32.mrb[0].mxu0
        %v767 = vadd.f32 0.0, %v766
        %v768 = vpop.f32.mrb[0].mxu0
        %v769 = vpop.f32.mrb[0].mxu0
        %v770 = vadd.f32 0.0, %v769
        %v771 = vpop.f32.mrb[0].mxu0
        %772 = vmatprep.mubr.bf16.mxu0 %v591
        %773 = vmatmul.mubr.bf16.gmra.mrb[0].mxu0 %v590
        %v774 = vpop.f32.mrb[0].mxu0
        %v775 = vadd.f32 0.0, %v774
        %v776 = vpop.f32.mrb[0].mxu0
        %v777 = vpop.f32.mrb[0].mxu0
        %v778 = vadd.f32 0.0, %v777
        %v779 = vpop.f32.mrb[0].mxu0
        %780 = vmatprep.mubr.bf16.mxu0 %v593
        %781 = vmatmul.mubr.bf16.gmra.mrb[0].mxu0 %v592
        %v782 = vpop.f32.mrb[0].mxu0
        %v783 = vadd.f32 0.0, %v782
        %v784 = vpop.f32.mrb[0].mxu0
        %v785 = vpop.f32.mrb[0].mxu0
        %v786 = vadd.f32 0.0, %v785
        %v787 = vpop.f32.mrb[0].mxu0
        %788 = vmatprep.mubr.bf16.mxu0 %v595
        %789 = vmatmul.mubr.bf16.gmra.mrb[0].mxu0 %v594
        %v790 = vpop.f32.mrb[0].mxu0
        %v791 = vadd.f32 0.0, %v790
        %v792 = vpop.f32.mrb[0].mxu0
        %v793 = vpop.f32.mrb[0].mxu0
        %v794 = vadd.f32 0.0, %v793
        %v795 = vpop.f32.mrb[0].mxu0
        %796 = vmatprep.mubr.bf16.mxu0 %v597
        %797 = vmatmul.mubr.bf16.gmra.mrb[0].mxu0 %v596
        %v798 = vpop.f32.mrb[0].mxu0
        %v799 = vadd.f32 0.0, %v798
        %v800 = vpop.f32.mrb[0].mxu0
        %v801 = vpop.f32.mrb[0].mxu0
        %v802 = vadd.f32 0.0, %v801
        %v803 = vpop.f32.mrb[0].mxu0
        %804 = vmatprep.mubr.bf16.mxu0 %v599
        %805 = vmatmul.mubr.bf16.gmra.mrb[0].mxu0 %v598
        %v806 = vpop.f32.mrb[0].mxu0
        %v807 = vadd.f32 0.0, %v806
        %v808 = vpop.f32.mrb[0].mxu0
        %v809 = vpop.f32.mrb[0].mxu0
        %v810 = vadd.f32 0.0, %v809
        %v811 = vpop.f32.mrb[0].mxu0
        %812 = vmatprep.mubr.bf16.mxu0 %v601
        %813 = vmatmul.mubr.bf16.gmra.mrb[0].mxu0 %v600
        %v814 = vpop.f32.mrb[0].mxu0
        %v815 = vadd.f32 0.0, %v814
        %v816 = vpop.f32.mrb[0].mxu0
        %v817 = vpop.f32.mrb[0].mxu0
        %v818 = vadd.f32 0.0, %v817
        %v819 = vpop.f32.mrb[0].mxu0
        %820 = vmatprep.mubr.bf16.mxu0 %v603
        %821 = vmatmul.mubr.bf16.gmra.mrb[0].mxu0 %v602
        %v822 = vpop.f32.mrb[0].mxu0
        %v823 = vadd.f32 0.0, %v822
        %v824 = vpop.f32.mrb[0].mxu0
        %v825 = vpop.f32.mrb[0].mxu0
        %v826 = vadd.f32 0.0, %v825
        %v827 = vpop.f32.mrb[0].mxu0
        %828 = vdwg.mxu0
        %v829 = vadd.f32 %v572, %v767
        %v830 = vadd.f32 %v573, %v770
        %v831 = vadd.f32 %v574, %v775
        %v832 = vadd.f32 %v575, %v778
        %v833 = vadd.f32 %v576, %v783
        %v834 = vadd.f32 %v577, %v786
        %v835 = vadd.f32 %v578, %v791
        %v836 = vadd.f32 %v579, %v794
        %v837 = vadd.f32 %v580, %v799
        %v838 = vadd.f32 %v581, %v802
        %v839 = vadd.f32 %v582, %v807
        %v840 = vadd.f32 %v583, %v810
        %v841 = vadd.f32 %v584, %v815
        %v842 = vadd.f32 %v585, %v818
        %v843 = vadd.f32 %v586, %v823
        %v844 = vadd.f32 %v587, %v826
        %845 = vst [vmem:[#allocation2] sm:$0xff] %v829
        %846 = vst [vmem:[#allocation2 + $0x8] sm:$0xff] %v830
        %847 = vst [vmem:[#allocation2 + $0x10] sm:$0xff] %v831
        %848 = vst [vmem:[#allocation2 + $0x18] sm:$0xff] %v832
        %849 = vst [vmem:[#allocation2 + $0x20] sm:$0xff] %v833
        %850 = vst [vmem:[#allocation2 + $0x28] sm:$0xff] %v834
        %851 = vst [vmem:[#allocation2 + $0x30] sm:$0xff] %v835
        %852 = vst [vmem:[#allocation2 + $0x38] sm:$0xff] %v836
        %853 = vst [vmem:[#allocation2 + $0x40] sm:$0xff] %v837
        %854 = vst [vmem:[#allocation2 + $0x48] sm:$0xff] %v838
        %855 = vst [vmem:[#allocation2 + $0x50] sm:$0xff] %v839
        %856 = vst [vmem:[#allocation2 + $0x58] sm:$0xff] %v840
        %857 = vst [vmem:[#allocation2 + $0x60] sm:$0xff] %v841
        %858 = vst [vmem:[#allocation2 + $0x68] sm:$0xff] %v842
        %859 = vst [vmem:[#allocation2 + $0x70] sm:$0xff] %v843
        %860 = vst [vmem:[#allocation2 + $0x78] sm:$0xff] %v844
        // Predicated region
        $region57: #{tpu_custom_call.1} parent=39 // pred_check
          %p861 = pneg %p287
        $region58: #{tpu_custom_call.1} parent=39 // pred_check_branch
          %863 = sbr.rel (%p861) target = $region60
        $region59: #{tpu_custom_call.1} parent=39 // pred_region
          %v864 = vld [vmem:[#allocation2] sm:$0xff]
          %v865 = vld [vmem:[#allocation2 + $0x8] sm:$0xff]
          %v866 = vld [vmem:[#allocation2 + $0x10] sm:$0xff]
          %v867 = vld [vmem:[#allocation2 + $0x18] sm:$0xff]
          %v868 = vld [vmem:[#allocation2 + $0x20] sm:$0xff]
          %v869 = vld [vmem:[#allocation2 + $0x28] sm:$0xff]
          %v870 = vld [vmem:[#allocation2 + $0x30] sm:$0xff]
          %v871 = vld [vmem:[#allocation2 + $0x38] sm:$0xff]
          %v872 = vld [vmem:[#allocation2 + $0x40] sm:$0xff]
          %v873 = vld [vmem:[#allocation2 + $0x48] sm:$0xff]
          %v874 = vld [vmem:[#allocation2 + $0x50] sm:$0xff]
          %v875 = vld [vmem:[#allocation2 + $0x58] sm:$0xff]
          %v876 = vld [vmem:[#allocation2 + $0x60] sm:$0xff]
          %v877 = vld [vmem:[#allocation2 + $0x68] sm:$0xff]
          %v878 = vld [vmem:[#allocation2 + $0x70] sm:$0xff]
          %v879 = vld [vmem:[#allocation2 + $0x78] sm:$0xff]
          %v880 = vadd.f32 %v864, %v307
          %v881 = vadd.f32 %v865, %v308
          %v882 = vadd.f32 %v866, %v309
          %v883 = vadd.f32 %v867, %v310
          %v884 = vadd.f32 %v868, %v311
          %v885 = vadd.f32 %v869, %v312
          %v886 = vadd.f32 %v870, %v313
          %v887 = vadd.f32 %v871, %v314
          %v888 = vadd.f32 %v872, %v315
          %v889 = vadd.f32 %v873, %v316
          %v890 = vadd.f32 %v874, %v317
          %v891 = vadd.f32 %v875, %v318
          %v892 = vadd.f32 %v876, %v319
          %v893 = vadd.f32 %v877, %v320
          %v894 = vadd.f32 %v878, %v321
          %v895 = vadd.f32 %v879, %v322
          %896 = vadd.xlane.f32.xlu0 %v880
          %v897 = vpop.xlane.xlu0 %896
          %898 = vadd.xlane.f32.xlu0 %v881
          %v899 = vpop.xlane.xlu0 %898
          %900 = vadd.xlane.f32.xlu0 %v882
          %v901 = vpop.xlane.xlu0 %900
          %902 = vadd.xlane.f32.xlu0 %v883
          %v903 = vpop.xlane.xlu0 %902
          %904 = vadd.xlane.f32.xlu0 %v884
          %v905 = vpop.xlane.xlu0 %904
          %906 = vadd.xlane.f32.xlu0 %v885
          %v907 = vpop.xlane.xlu0 %906
          %908 = vadd.xlane.f32.xlu0 %v886
          %v909 = vpop.xlane.xlu0 %908
          %910 = vadd.xlane.f32.xlu0 %v887
          %v911 = vpop.xlane.xlu0 %910
          %912 = vadd.xlane.f32.xlu0 %v888
          %v913 = vpop.xlane.xlu0 %912
          %914 = vadd.xlane.f32.xlu0 %v889
          %v915 = vpop.xlane.xlu0 %914
          %916 = vadd.xlane.f32.xlu0 %v890
          %v917 = vpop.xlane.xlu0 %916
          %918 = vadd.xlane.f32.xlu0 %v891
          %v919 = vpop.xlane.xlu0 %918
          %920 = vadd.xlane.f32.xlu0 %v892
          %v921 = vpop.xlane.xlu0 %920
          %922 = vadd.xlane.f32.xlu0 %v893
          %v923 = vpop.xlane.xlu0 %922
          %924 = vadd.xlane.f32.xlu0 %v894
          %v925 = vpop.xlane.xlu0 %924
          %926 = vadd.xlane.f32.xlu0 %v895
          %v927 = vpop.xlane.xlu0 %926
          %v928 = vmul.f32 %v897, 0.0078125
          %v929 = vmul.f32 %v899, 0.0078125
          %v930 = vmul.f32 %v901, 0.0078125
          %v931 = vmul.f32 %v903, 0.0078125
          %v932 = vmul.f32 %v905, 0.0078125
          %v933 = vmul.f32 %v907, 0.0078125
          %v934 = vmul.f32 %v909, 0.0078125
          %v935 = vmul.f32 %v911, 0.0078125
          %v936 = vmul.f32 %v913, 0.0078125
          %v937 = vmul.f32 %v915, 0.0078125
          %v938 = vmul.f32 %v917, 0.0078125
          %v939 = vmul.f32 %v919, 0.0078125
          %v940 = vmul.f32 %v921, 0.0078125
          %v941 = vmul.f32 %v923, 0.0078125
          %v942 = vmul.f32 %v925, 0.0078125
          %v943 = vmul.f32 %v927, 0.0078125
          %v944 = vsub.f32 %v880, %v928
          %v945 = vsub.f32 %v881, %v929
          %v946 = vsub.f32 %v882, %v930
          %v947 = vsub.f32 %v883, %v931
          %v948 = vsub.f32 %v884, %v932
          %v949 = vsub.f32 %v885, %v933
          %v950 = vsub.f32 %v886, %v934
          %v951 = vsub.f32 %v887, %v935
          %v952 = vsub.f32 %v888, %v936
          %v953 = vsub.f32 %v889, %v937
          %v954 = vsub.f32 %v890, %v938
          %v955 = vsub.f32 %v891, %v939
          %v956 = vsub.f32 %v892, %v940
          %v957 = vsub.f32 %v893, %v941
          %v958 = vsub.f32 %v894, %v942
          %v959 = vsub.f32 %v895, %v943
          %v960 = vmul.f32 %v944, %v944
          %v961 = vmul.f32 %v945, %v945
          %v962 = vmul.f32 %v946, %v946
          %v963 = vmul.f32 %v947, %v947
          %v964 = vmul.f32 %v948, %v948
          %v965 = vmul.f32 %v949, %v949
          %v966 = vmul.f32 %v950, %v950
          %v967 = vmul.f32 %v951, %v951
          %v968 = vmul.f32 %v952, %v952
          %v969 = vmul.f32 %v953, %v953
          %v970 = vmul.f32 %v954, %v954
          %v971 = vmul.f32 %v955, %v955
          %v972 = vmul.f32 %v956, %v956
          %v973 = vmul.f32 %v957, %v957
          %v974 = vmul.f32 %v958, %v958
          %v975 = vmul.f32 %v959, %v959
          %976 = vadd.xlane.f32.xlu0 %v960
          %v977 = vpop.xlane.xlu0 %976
          %978 = vadd.xlane.f32.xlu0 %v961
          %v979 = vpop.xlane.xlu0 %978
          %980 = vadd.xlane.f32.xlu0 %v962
          %v981 = vpop.xlane.xlu0 %980
          %982 = vadd.xlane.f32.xlu0 %v963
          %v983 = vpop.xlane.xlu0 %982
          %984 = vadd.xlane.f32.xlu0 %v964
          %v985 = vpop.xlane.xlu0 %984
          %986 = vadd.xlane.f32.xlu0 %v965
          %v987 = vpop.xlane.xlu0 %986
          %988 = vadd.xlane.f32.xlu0 %v966
          %v989 = vpop.xlane.xlu0 %988
          %990 = vadd.xlane.f32.xlu0 %v967
          %v991 = vpop.xlane.xlu0 %990
          %992 = vadd.xlane.f32.xlu0 %v968
          %v993 = vpop.xlane.xlu0 %992
          %994 = vadd.xlane.f32.xlu0 %v969
          %v995 = vpop.xlane.xlu0 %994
          %996 = vadd.xlane.f32.xlu0 %v970
          %v997 = vpop.xlane.xlu0 %996
          %998 = vadd.xlane.f32.xlu0 %v971
          %v999 = vpop.xlane.xlu0 %998
          %1000 = vadd.xlane.f32.xlu0 %v972
          %v1001 = vpop.xlane.xlu0 %1000
          %1002 = vadd.xlane.f32.xlu0 %v973
          %v1003 = vpop.xlane.xlu0 %1002
          %1004 = vadd.xlane.f32.xlu0 %v974
          %v1005 = vpop.xlane.xlu0 %1004
          %1006 = vadd.xlane.f32.xlu0 %v975
          %v1007 = vpop.xlane.xlu0 %1006
          %v1008 = vmul.f32 %v977, 0.0078125
          %v1009 = vmul.f32 %v979, 0.0078125
          %v1010 = vmul.f32 %v981, 0.0078125
          %v1011 = vmul.f32 %v983, 0.0078125
          %v1012 = vmul.f32 %v985, 0.0078125
          %v1013 = vmul.f32 %v987, 0.0078125
          %v1014 = vmul.f32 %v989, 0.0078125
          %v1015 = vmul.f32 %v991, 0.0078125
          %v1016 = vmul.f32 %v993, 0.0078125
          %v1017 = vmul.f32 %v995, 0.0078125
          %v1018 = vmul.f32 %v997, 0.0078125
          %v1019 = vmul.f32 %v999, 0.0078125
          %v1020 = vmul.f32 %v1001, 0.0078125
          %v1021 = vmul.f32 %v1003, 0.0078125
          %v1022 = vmul.f32 %v1005, 0.0078125
          %v1023 = vmul.f32 %v1007, 0.0078125
          %v1024 = vadd.f32 %v1008, 1e-05
          %v1025 = vadd.f32 %v1009, 1e-05
          %v1026 = vadd.f32 %v1010, 1e-05
          %v1027 = vadd.f32 %v1011, 1e-05
          %v1028 = vadd.f32 %v1012, 1e-05
          %v1029 = vadd.f32 %v1013, 1e-05
          %v1030 = vadd.f32 %v1014, 1e-05
          %v1031 = vadd.f32 %v1015, 1e-05
          %v1032 = vadd.f32 %v1016, 1e-05
          %v1033 = vadd.f32 %v1017, 1e-05
          %v1034 = vadd.f32 %v1018, 1e-05
          %v1035 = vadd.f32 %v1019, 1e-05
          %v1036 = vadd.f32 %v1020, 1e-05
          %v1037 = vadd.f32 %v1021, 1e-05
          %v1038 = vadd.f32 %v1022, 1e-05
          %v1039 = vadd.f32 %v1023, 1e-05
          %v1040 = vrsqrt.pop %v1024
          %v1041 = vrsqrt.pop %v1025
          %v1042 = vrsqrt.pop %v1026
          %v1043 = vrsqrt.pop %v1027
          %v1044 = vrsqrt.pop %v1028
          %v1045 = vrsqrt.pop %v1029
          %v1046 = vrsqrt.pop %v1030
          %v1047 = vrsqrt.pop %v1031
          %v1048 = vrsqrt.pop %v1032
          %v1049 = vrsqrt.pop %v1033
          %v1050 = vrsqrt.pop %v1034
          %v1051 = vrsqrt.pop %v1035
          %v1052 = vrsqrt.pop %v1036
          %v1053 = vrsqrt.pop %v1037
          %v1054 = vrsqrt.pop %v1038
          %v1055 = vrsqrt.pop %v1039
          %v1056 = vmul.f32 %v944, %v1040
          %v1057 = vmul.f32 %v945, %v1041
          %v1058 = vmul.f32 %v946, %v1042
          %v1059 = vmul.f32 %v947, %v1043
          %v1060 = vmul.f32 %v948, %v1044
          %v1061 = vmul.f32 %v949, %v1045
          %v1062 = vmul.f32 %v950, %v1046
          %v1063 = vmul.f32 %v951, %v1047
          %v1064 = vmul.f32 %v952, %v1048
          %v1065 = vmul.f32 %v953, %v1049
          %v1066 = vmul.f32 %v954, %v1050
          %v1067 = vmul.f32 %v955, %v1051
          %v1068 = vmul.f32 %v956, %v1052
          %v1069 = vmul.f32 %v957, %v1053
          %v1070 = vmul.f32 %v958, %v1054
          %v1071 = vmul.f32 %v959, %v1055
          %v1072 = vld [vmem:[%s3] sm:$0x1]
          %v1074 = vlaneseq
          %v1075 = vshrl.u32 %v1074, 7
          %v1076 = vsub.s32 0, %v1075
          %v1077 = vrot.slane %v1072, %v1076
          %v1079 = vmul.f32 %v1056, %v1077
          %v1080 = vmul.f32 %v1057, %v1077
          %v1081 = vmul.f32 %v1058, %v1077
          %v1082 = vmul.f32 %v1059, %v1077
          %v1083 = vmul.f32 %v1060, %v1077
          %v1084 = vmul.f32 %v1061, %v1077
          %v1085 = vmul.f32 %v1062, %v1077
          %v1086 = vmul.f32 %v1063, %v1077
          %v1087 = vmul.f32 %v1064, %v1077
          %v1088 = vmul.f32 %v1065, %v1077
          %v1089 = vmul.f32 %v1066, %v1077
          %v1090 = vmul.f32 %v1067, %v1077
          %v1091 = vmul.f32 %v1068, %v1077
          %v1092 = vmul.f32 %v1069, %v1077
          %v1093 = vmul.f32 %v1070, %v1077
          %v1094 = vmul.f32 %v1071, %v1077
          %v1095 = vld [vmem:[%s4] sm:$0x1]
          %v1097 = vlaneseq
          %v1098 = vshrl.u32 %v1097, 7
          %v1099 = vsub.s32 0, %v1098
          %v1100 = vrot.slane %v1095, %v1099
          %v1102 = vadd.f32 %v1079, %v1100
          %v1103 = vadd.f32 %v1080, %v1100
          %v1104 = vadd.f32 %v1081, %v1100
          %v1105 = vadd.f32 %v1082, %v1100
          %v1106 = vadd.f32 %v1083, %v1100
          %v1107 = vadd.f32 %v1084, %v1100
          %v1108 = vadd.f32 %v1085, %v1100
          %v1109 = vadd.f32 %v1086, %v1100
          %v1110 = vadd.f32 %v1087, %v1100
          %v1111 = vadd.f32 %v1088, %v1100
          %v1112 = vadd.f32 %v1089, %v1100
          %v1113 = vadd.f32 %v1090, %v1100
          %v1114 = vadd.f32 %v1091, %v1100
          %v1115 = vadd.f32 %v1092, %v1100
          %v1116 = vadd.f32 %v1093, %v1100
          %v1117 = vadd.f32 %v1094, %v1100
          %1118 = vst [vmem:[%s283] sm:$0xff] %v1102
          %1119 = vst [vmem:[%s283 + $0x8] sm:$0xff] %v1103
          %1120 = vst [vmem:[%s283 + $0x10] sm:$0xff] %v1104
          %1121 = vst [vmem:[%s283 + $0x18] sm:$0xff] %v1105
          %1122 = vst [vmem:[%s283 + $0x20] sm:$0xff] %v1106
          %1123 = vst [vmem:[%s283 + $0x28] sm:$0xff] %v1107
          %1124 = vst [vmem:[%s283 + $0x30] sm:$0xff] %v1108
          %1125 = vst [vmem:[%s283 + $0x38] sm:$0xff] %v1109
          %1126 = vst [vmem:[%s283 + $0x40] sm:$0xff] %v1110
          %1127 = vst [vmem:[%s283 + $0x48] sm:$0xff] %v1111
          %1128 = vst [vmem:[%s283 + $0x50] sm:$0xff] %v1112
          %1129 = vst [vmem:[%s283 + $0x58] sm:$0xff] %v1113
          %1130 = vst [vmem:[%s283 + $0x60] sm:$0xff] %v1114
          %1131 = vst [vmem:[%s283 + $0x68] sm:$0xff] %v1115
          %1132 = vst [vmem:[%s283 + $0x70] sm:$0xff] %v1116
          %1133 = vst [vmem:[%s283 + $0x78] sm:$0xff] %v1117
        $region60: #{tpu_custom_call.1} parent=39 // pred_fallthru
          _
        %s1134 = sand.u32 %s153, 1
        %s1135 = scalar_lea.sflag [#allocation5], %s1134
        %s1136 = sand.u32 %s153, 1
        %s1137 = smul.addr %s1136, 128
        %s1138 = scalar_lea.vmem [#allocation9], %s1137
        // Predicated region
        $region61: #{tpu_custom_call.1} parent=39 // pred_check
          %p1139 = pneg %p163
        $region62: #{tpu_custom_call.1} parent=39 // pred_check_branch
          %1141 = sbr.rel (%p1139) target = $region64
        $region63: #{tpu_custom_call.1} parent=39 // pred_region
          %s1142 = smul.u32 16, %s27
          %s1144 = ssub.s32 2048, 2048
          %1145 = vsyncadd %s1135, %s1144
          %s1146 = smul.addr %s1142, 128
          %s1147 = scalar_lea.hbm %s5, %s1146
          %s1148 = sshll.u32 %s1138, 4
          %s1149 = int_to_ptr.vmem [resolvable:$true] %s1148
          %1154 = dma.vmem_to_hbm [thread:$0]  %s1149, 2048, %s1147, %s1135, 128, 128, 8
        $region64: #{tpu_custom_call.1} parent=39 // pred_fallthru
          _
      $region40: #{tpu_custom_call.1} parent=5 // pred_fallthru
        _
      %p1155 = scmp.le.s32.totalorder 2, %s18
      // Predicated region
      $region65: #{tpu_custom_call.1} parent=5 // pred_check
        %p1156 = pneg %p1155
      $region66: #{tpu_custom_call.1} parent=5 // pred_check_branch
        %1158 = sbr.rel (%p1156) target = $region68
      $region67: #{tpu_custom_call.1} parent=5 // pred_region
        %s1159 = ssub.s32 %s18, 2
        // Predicated region
        $region69: #{tpu_custom_call.1} parent=67 // pred_check
          %p1160 = pneg %p169
        $region70: #{tpu_custom_call.1} parent=67 // pred_check_branch
          %1162 = sbr.rel (%p1160) target = $region72
        $region71: #{tpu_custom_call.1} parent=67 // pred_region
          %s1163 = sand.u32 %s154, 1
          %s1164 = scalar_lea.sflag [#allocation5], %s1163
          %s1165 = sand.u32 %s154, 1
          %s1166 = smul.addr %s1165, 128
          %s1167 = scalar_lea.vmem [#allocation9], %s1166
          %1168 = dma.done %s1164, 2048
        $region72: #{tpu_custom_call.1} parent=67 // pred_fallthru
          _
      $region68: #{tpu_custom_call.1} parent=5 // pred_fallthru
        _
    $region6: #{tpu_custom_call.1} parent=1 // loop_footer
      %s22 = sadd.s32 1, %s18
    $region7: #{tpu_custom_call.1} parent=1 // loop_footer_branch
      %17 = sbr.rel target = $region3
    $region8: #{tpu_custom_call.1} parent=1 // loop_exit
      _
    %1169 = vsyncpa [#allocation4], 1
    %s1170 = scalar_lea.sflag [#allocation4], 1
    %1171 = vsyncpa %s1170, 1
    %1172 = vsyncpa [#allocation7], 1
    %1173 = vsyncpa [#allocation5], 1
    %s1174 = scalar_lea.sflag [#allocation5], 1
    %1175 = vsyncpa %s1174, 1

</llo_original>
